<compile_context>
chip_gen: v6e
topology: v6e:2x2x1
jax: 0.10.0
libtpu: 0.0.40
codegen_flags: <defaults>
</compile_context>

<pallas_src>
import math
from functools import partial

import jax
import jax.numpy as jnp
from jax import lax
from jax.experimental import pallas as pl
from jax.experimental.pallas import tpu as pltpu


def _graph_encoder_kernel(hq_ref, hkv_ref, bias_ref, wq_ref, wkv_ref,
                          bq_ref, bkv_ref, o_ref, kv_ref,
                          *, num_heads, head_dim, mxu_dtype):
    # hq_ref:  (1, TQ, H)  query-tile hidden states (mxu_dtype)
    # hkv_ref: (1, S,  H)  full-sequence hidden states for K/V (mxu_dtype)
    # bias_ref:(1, 1,  S)  additive attention-mask bias (f32)
    # wq_ref:  (H, H)      Wq^T with 1/sqrt(head_dim) pre-folded
    # wkv_ref: (H, 2H)     [Wk^T | Wv^T] fused
    # bq_ref:  (1, H)      bq * scale (f32)
    # bkv_ref: (1, 2H)     [bk | bv] (f32)
    # o_ref:   (1, TQ, H)  node embeddings out
    # kv_ref:  (S, 2H)     persistent VMEM scratch: cached [K | V] in mxu_dtype
    H = num_heads * head_dim

    # ---- K/V projection: compute once per batch (qi == 0), cache in VMEM ----
    @pl.when(pl.program_id(1) == 0)
    def _():
        hkv = hkv_ref[0]                                   # (S, H)
        # One half (K, then V) at a time: the transient f32 tensor is (S, H)
        # and never coexists with a full f32 (S, 2H) staging copy.
        for half in range(2):
            c0 = half * H
            kvh = jnp.dot(hkv, wkv_ref[:, c0:c0 + H],
                          preferred_element_type=jnp.float32)
            kvh = kvh + bkv_ref[:, c0:c0 + H]
            kv_ref[:, c0:c0 + H] = kvh.astype(kv_ref.dtype)

    # ---- Q projection for this query tile (scale folded into Wq / bq) ----
    hq = hq_ref[0]                                         # (TQ, H)
    q = jnp.dot(hq, wq_ref[...], preferred_element_type=jnp.float32)
    q = (q + bq_ref[...]).astype(mxu_dtype)                # (TQ, H)

    bias = bias_ref[0]                                     # (1, S) broadcasts over rows

    # ---- Per-head attention; each head is fully consumed before the next ----
    for hd in range(num_heads):                            # static slices: zero-cost views
        lo = hd * head_dim
        qh = q[:, lo:lo + head_dim]                        # (TQ, dh)
        kh = kv_ref[:, lo:lo + head_dim]                   # (S,  dh)  cached K slice
        vh = kv_ref[:, H + lo:H + lo + head_dim]           # (S,  dh)  cached V slice

        # Contract over the last dims of both operands (no explicit transpose).
        s = lax.dot_general(qh, kh,
                            dimension_numbers=(((1,), (1,)), ((), ())),
                            preferred_element_type=jnp.float32)   # (TQ, S)
        s = s + bias
        s = s - jnp.max(s, axis=-1, keepdims=True)
        p = jnp.exp(s)
        denom = jnp.sum(p, axis=-1, keepdims=True)          # (TQ, 1)
        # dropout omitted (identity in eval mode)
        ctx = jnp.dot(p.astype(mxu_dtype), vh,
                      preferred_element_type=jnp.float32)    # (TQ, dh)
        # Normalize AFTER the PV matmul: (TQ, dh) multiplies instead of (TQ, S).
        ctx = ctx * pl.reciprocal(denom, approx=True)
        # Write into the (lane-dense) output block at a static lane offset; the
        # HBM writeback of the whole (TQ, H) block stays a single dense DMA.
        o_ref[0, :, lo:lo + head_dim] = ctx.astype(o_ref.dtype)


def _pick_q_tile(S, max_tile, itemsize):
    """Largest query tile <= max_tile respecting sublane packing for the dtype."""
    min_mult = 8 if itemsize >= 4 else 16     # bf16/fp16 pack 2 rows per sublane
    if S <= max_tile:
        return S                              # full dim is always a legal block
    best = None
    for t in range(min(max_tile, S), min_mult - 1, -1):
        if S % t != 0 or t % min_mult != 0:
            continue
        if t % 128 == 0:
            return t                          # prefer lane/sublane-friendly tiles
        if best is None:
            best = t
    if best is not None:
        return best
    # Awkward S: use a non-dividing tile (grid uses cdiv; last block is partial,
    # padded query rows are never written back) rather than tq = S blowing VMEM.
    return max(min_mult, (max_tile // min_mult) * min_mult)


def _vmem_limit_bytes():
    """Scoped-VMEM limit sized from the actual chip, with a safe fallback."""
    try:
        cap = int(pltpu.get_tpu_info().vmem_capacity_bytes)
    except Exception:
        cap = 64 * 1024 * 1024
    # Leave headroom for compiler-internal scratch.
    return max(32 * 1024 * 1024, min(cap - 16 * 1024 * 1024, 128 * 1024 * 1024))


def graph_encoder_forward(hidden_states, input_mask, params, *, num_heads,
                          q_tile=512, mxu_dtype=None):
    B, S, H = hidden_states.shape
    head_dim = H // num_heads
    out_dtype = hidden_states.dtype
    if mxu_dtype is None:
        mxu_dtype = out_dtype
    mxu_dtype = jnp.dtype(mxu_dtype)

    tq = _pick_q_tile(S, q_tile, int(mxu_dtype.itemsize))
    num_q_tiles = pl.cdiv(S, tq)

    scale = 1.0 / math.sqrt(head_dim)
    # nn.Linear(x) = x @ W.T + b  -> pass W.T so the kernel does x @ W_t + b.
    wq_t = (params["wq"].T * scale).astype(mxu_dtype)                        # (H, H)
    wkv_t = jnp.concatenate([params["wk"].T, params["wv"].T], axis=1
                            ).astype(mxu_dtype)                              # (H, 2H)
    bq = (params["bq"] * scale).reshape(1, H).astype(jnp.float32)
    bkv = jnp.concatenate([params["bk"], params["bv"]]
                          ).reshape(1, 2 * H).astype(jnp.float32)
    # Precomputed additive attention-mask bias: (1 - mask) * -10000.
    mask_bias = ((1.0 - input_mask.astype(jnp.float32)) * -10000.0
                 ).reshape(B, 1, S)
    h = hidden_states.astype(mxu_dtype)

    kernel = partial(_graph_encoder_kernel, num_heads=num_heads,
                     head_dim=head_dim, mxu_dtype=mxu_dtype)

    # Advisory cost estimate (K/V projection done once per batch, Q per tile).
    itm = int(mxu_dtype.itemsize)
    proj_flops = 2 * B * (S * H * H + S * (2 * H) * H)
    attn_flops = 4 * B * S * S * H
    bytes_accessed = (2 * B * S * H * itm                   # hidden (Q tiles + K/V)
                      + 3 * H * H * itm                     # weights
                      + B * S * 4                           # mask bias
                      + B * S * H * int(jnp.dtype(out_dtype).itemsize))
    cost = pl.CostEstimate(flops=int(proj_flops + attn_flops),
                           transcendentals=int(B * num_heads * S * S),
                           bytes_accessed=int(bytes_accessed))

    return pl.pallas_call(
        kernel,
        out_shape=jax.ShapeDtypeStruct((B, S, H), out_dtype),
        grid=(B, num_q_tiles),
        in_specs=[
            pl.BlockSpec((1, tq, H), lambda b, qi: (b, qi, 0)),   # Q-tile hidden
            pl.BlockSpec((1, S, H), lambda b, qi: (b, 0, 0)),     # full-S hidden (used at qi==0)
            pl.BlockSpec((1, 1, S), lambda b, qi: (b, 0, 0)),     # additive mask bias
            pl.BlockSpec((H, H), lambda b, qi: (0, 0)),           # Wq^T * scale
            pl.BlockSpec((H, 2 * H), lambda b, qi: (0, 0)),       # [Wk^T | Wv^T]
            pl.BlockSpec((1, H), lambda b, qi: (0, 0)),           # bq * scale
            pl.BlockSpec((1, 2 * H), lambda b, qi: (0, 0)),       # [bk | bv]
        ],
        out_specs=pl.BlockSpec((1, tq, H), lambda b, qi: (b, qi, 0)),
        scratch_shapes=[pltpu.VMEM((S, 2 * H), mxu_dtype)],       # cached K/V projection
        compiler_params=pltpu.CompilerParams(
            # qi carries the cached K/V scratch -> "arbitrary"; batch stays parallel.
            dimension_semantics=("parallel", "arbitrary"),
            vmem_limit_bytes=_vmem_limit_bytes()),
        cost_estimate=cost,
    )(h, h, mask_bias, wq_t, wkv_t, bq, bkv)


def graph_encoder_reference(hidden_states, input_mask, params, *, num_heads):
    """Pure-JAX replica of the PyTorch forward (non-RGAT, non-POS path)."""
    B, S, H = hidden_states.shape
    dh = H // num_heads
    q = hidden_states @ params["wq"].T + params["bq"]
    k = hidden_states @ params["wk"].T + params["bk"]
    v = hidden_states @ params["wv"].T + params["bv"]

    def split(x):  # transpose_for_scores: (B,S,H) -> (B,nh,S,dh)
        return x.reshape(B, S, num_heads, dh).transpose(0, 2, 1, 3)

    q, k, v = split(q), split(k), split(v)
    scores = jnp.einsum("bhqd,bhkd->bhqk", q, k) / math.sqrt(dh)
    amask = (1.0 - input_mask)[:, None, None, :] * -10000.0
    probs = jax.nn.softmax(scores + amask, axis=-1)
    ctx = jnp.einsum("bhqk,bhkd->bhqd", probs, v)
    return ctx.transpose(0, 2, 1, 3).reshape(B, S, H)


if __name__ == "__main__":
    # Small config consistent with the module: hidden_size=32, heads=4, seq=8
    B, S, H, NUM_HEADS = 2, 8, 32, 4

    key = jax.random.PRNGKey(0)
    k_h, k_wq, k_wk, k_wv, k_bq, k_bk, k_bv = jax.random.split(key, 7)

    hidden_states = jax.random.normal(k_h, (B, S, H), dtype=jnp.float32)
    # input_mask: 1.0 = real token, 0.0 = padding (pad last 2 tokens of batch 0)
    input_mask = jnp.ones((B, S), dtype=jnp.float32).at[0, -2:].set(0.0)

    params = {
        "wq": 0.02 * jax.random.normal(k_wq, (H, H), dtype=jnp.float32),
        "wk": 0.02 * jax.random.normal(k_wk, (H, H), dtype=jnp.float32),
        "wv": 0.02 * jax.random.normal(k_wv, (H, H), dtype=jnp.float32),
        "bq": 0.02 * jax.random.normal(k_bq, (H,), dtype=jnp.float32),
        "bk": 0.02 * jax.random.normal(k_bk, (H,), dtype=jnp.float32),
        "bv": 0.02 * jax.random.normal(k_bv, (H,), dtype=jnp.float32),
    }

    ref = graph_encoder_reference(hidden_states, input_mask, params,
                                  num_heads=NUM_HEADS)

    # f32 MXU path (default): tight check (approx-reciprocal tolerance).
    out = graph_encoder_forward(hidden_states, input_mask, params,
                                num_heads=NUM_HEADS)
    out = jax.block_until_ready(out)
    assert out.shape == (B, S, H)
    assert jnp.allclose(out, ref, atol=2e-3, rtol=2e-3), (
        f"f32 path max abs err {jnp.max(jnp.abs(out - ref))}")

    # bf16 MXU-operand path (f32 accumulation / softmax): loose check.
    out_bf16 = graph_encoder_forward(hidden_states, input_mask, params,
                                     num_heads=NUM_HEADS,
                                     mxu_dtype=jnp.bfloat16)
    out_bf16 = jax.block_until_ready(out_bf16)
    assert out_bf16.shape == (B, S, H)
    assert jnp.allclose(out_bf16.astype(jnp.float32), ref,
                        atol=5e-2, rtol=5e-2), (
        f"bf16 path max abs err {jnp.max(jnp.abs(out_bf16.astype(jnp.float32) - ref))}")

    print("KERNEL_OK")
</pallas_src>

<mosaic_0001>
module attributes {stable_mosaic.version = 11 : i64} {
  func.func @_graph_encoder_kernel(%arg0: i32, %arg1: i32, %arg2: memref<1x8x32xf32, #tpu.memory_space<vmem>>, %arg3: memref<1x8x32xf32, #tpu.memory_space<vmem>>, %arg4: memref<1x1x8xf32, #tpu.memory_space<vmem>>, %arg5: memref<32x32xf32, #tpu.memory_space<vmem>>, %arg6: memref<32x64xf32, #tpu.memory_space<vmem>>, %arg7: memref<1x32xf32, #tpu.memory_space<vmem>>, %arg8: memref<1x64xf32, #tpu.memory_space<vmem>>, %arg9: memref<1x8x32xf32, #tpu.memory_space<vmem>>, %arg10: memref<8x64xf32, #tpu.memory_space<vmem>>) attributes {dimension_semantics = [#tpu.dimension_semantics<parallel>, #tpu.dimension_semantics<arbitrary>], iteration_bounds = array<i64: 2, 1>, scalar_prefetch = 0 : i64, scratch_operands = 1 : i64, tpu.core_type = #tpu.core_type<tc>, window_params = [{transform_indices = @transform_0, window_bounds = array<i64: 1, 8, 32>}, {transform_indices = @transform_1, window_bounds = array<i64: 1, 8, 32>}, {transform_indices = @transform_2, window_bounds = array<i64: 1, 1, 8>}, {pipeline_mode = #tpu.pipeline_mode<synchronous>, transform_indices = @transform_3, window_bounds = array<i64: 32, 32>}, {pipeline_mode = #tpu.pipeline_mode<synchronous>, transform_indices = @transform_4, window_bounds = array<i64: 32, 64>}, {pipeline_mode = #tpu.pipeline_mode<synchronous>, transform_indices = @transform_5, window_bounds = array<i64: 1, 32>}, {pipeline_mode = #tpu.pipeline_mode<synchronous>, transform_indices = @transform_6, window_bounds = array<i64: 1, 64>}, {transform_indices = @transform_7, window_bounds = array<i64: 1, 8, 32>}]} {
    %c0_i32 = arith.constant 0 : i32
    %0 = arith.cmpi eq, %arg1, %c0_i32 : i32
    %1 = arith.extui %0 : i1 to i32
    %c0_i32_0 = arith.constant 0 : i32
    %2 = arith.cmpi ne, %1, %c0_i32_0 : i32
    scf.if %2 {
      %c0_47 = arith.constant 0 : index
      %c0_48 = arith.constant 0 : index
      %c0_49 = arith.constant 0 : index
      %92 = vector.load %arg3[%c0_47, %c0_48, %c0_49] : memref<1x8x32xf32, #tpu.memory_space<vmem>>, vector<1x8x32xf32>
      %93 = vector.shape_cast %92 : vector<1x8x32xf32> to vector<8x32xf32>
      %c0_50 = arith.constant 0 : index
      %c0_51 = arith.constant 0 : index
      %94 = vector.load %arg6[%c0_50, %c0_51] : memref<32x64xf32, #tpu.memory_space<vmem>>, vector<32x32xf32>
      %cst_52 = arith.constant dense<0.000000e+00> : vector<8x32xf32>
      %95 = tpu.matmul %93, %94, %cst_52 {dimension_numbers = #tpu.dot_dimension_numbers<[1], [0], [0], [1], [0, 0, 1, 1], [], []>} : vector<8x32xf32>, vector<32x32xf32>, vector<8x32xf32> -> vector<8x32xf32>
      %c0_53 = arith.constant 0 : index
      %c0_54 = arith.constant 0 : index
      %96 = vector.load %arg8[%c0_53, %c0_54] : memref<1x64xf32, #tpu.memory_space<vmem>>, vector<1x32xf32>
      %97 = vector.broadcast %96 : vector<1x32xf32> to vector<8x32xf32>
      %98 = arith.addf %95, %97 : vector<8x32xf32>
      %c0_55 = arith.constant 0 : index
      %c0_56 = arith.constant 0 : index
      %99 = vector.load %arg10[%c0_55, %c0_56] : memref<8x64xf32, #tpu.memory_space<vmem>>, vector<8x32xf32>
      tpu.vector_store %arg10[%c0_55, %c0_56], %98 {strides = array<i32>} : memref<8x64xf32, #tpu.memory_space<vmem>>, vector<8x32xf32>,
      %c0_57 = arith.constant 0 : index
      %c32_58 = arith.constant 32 : index
      %100 = vector.load %arg6[%c0_57, %c32_58] : memref<32x64xf32, #tpu.memory_space<vmem>>, vector<32x32xf32>
      %cst_59 = arith.constant dense<0.000000e+00> : vector<8x32xf32>
      %101 = tpu.matmul %93, %100, %cst_59 {dimension_numbers = #tpu.dot_dimension_numbers<[1], [0], [0], [1], [0, 0, 1, 1], [], []>} : vector<8x32xf32>, vector<32x32xf32>, vector<8x32xf32> -> vector<8x32xf32>
      %c0_60 = arith.constant 0 : index
      %c32_61 = arith.constant 32 : index
      %102 = vector.load %arg8[%c0_60, %c32_61] : memref<1x64xf32, #tpu.memory_space<vmem>>, vector<1x32xf32>
      %103 = vector.broadcast %102 : vector<1x32xf32> to vector<8x32xf32>
      %104 = arith.addf %101, %103 : vector<8x32xf32>
      %c0_62 = arith.constant 0 : index
      %c32_63 = arith.constant 32 : index
      %105 = vector.load %arg10[%c0_62, %c32_63] : memref<8x64xf32, #tpu.memory_space<vmem>>, vector<8x32xf32>
      tpu.vector_store %arg10[%c0_62, %c32_63], %104 {strides = array<i32>} : memref<8x64xf32, #tpu.memory_space<vmem>>, vector<8x32xf32>,
    } else {
    }
    %c0 = arith.constant 0 : index
    %c0_1 = arith.constant 0 : index
    %c0_2 = arith.constant 0 : index
    %3 = vector.load %arg2[%c0, %c0_1, %c0_2] : memref<1x8x32xf32, #tpu.memory_space<vmem>>, vector<1x8x32xf32>
    %4 = vector.shape_cast %3 : vector<1x8x32xf32> to vector<8x32xf32>
    %c0_3 = arith.constant 0 : index
    %c0_4 = arith.constant 0 : index
    %5 = vector.load %arg5[%c0_3, %c0_4] : memref<32x32xf32, #tpu.memory_space<vmem>>, vector<32x32xf32>
    %cst = arith.constant dense<0.000000e+00> : vector<8x32xf32>
    %6 = tpu.matmul %4, %5, %cst {dimension_numbers = #tpu.dot_dimension_numbers<[1], [0], [0], [1], [0, 0, 1, 1], [], []>} : vector<8x32xf32>, vector<32x32xf32>, vector<8x32xf32> -> vector<8x32xf32>
    %c0_5 = arith.constant 0 : index
    %c0_6 = arith.constant 0 : index
    %7 = vector.load %arg7[%c0_5, %c0_6] : memref<1x32xf32, #tpu.memory_space<vmem>>, vector<1x32xf32>
    %8 = vector.broadcast %7 : vector<1x32xf32> to vector<8x32xf32>
    %9 = arith.addf %6, %8 : vector<8x32xf32>
    %c0_7 = arith.constant 0 : index
    %c0_8 = arith.constant 0 : index
    %c0_9 = arith.constant 0 : index
    %10 = vector.load %arg4[%c0_7, %c0_8, %c0_9] : memref<1x1x8xf32, #tpu.memory_space<vmem>>, vector<1x1x8xf32>
    %11 = vector.shape_cast %10 : vector<1x1x8xf32> to vector<1x8xf32>
    %12 = vector.extract_strided_slice %9 {offsets = [0, 0], sizes = [8, 8], strides = [1, 1]} : vector<8x32xf32> to vector<8x8xf32>
    %c0_10 = arith.constant 0 : index
    %c0_11 = arith.constant 0 : index
    %13 = vector.load %arg10[%c0_10, %c0_11] : memref<8x64xf32, #tpu.memory_space<vmem>>, vector<8x8xf32>
    %c0_12 = arith.constant 0 : index
    %c32 = arith.constant 32 : index
    %14 = vector.load %arg10[%c0_12, %c32] : memref<8x64xf32, #tpu.memory_space<vmem>>, vector<8x8xf32>
    %cst_13 = arith.constant dense<0.000000e+00> : vector<8x8xf32>
    %15 = tpu.matmul %12, %13, %cst_13 {dimension_numbers = #tpu.dot_dimension_numbers<[1], [1], [0], [0], [0, 0, 1, 0], [], []>} : vector<8x8xf32>, vector<8x8xf32>, vector<8x8xf32> -> vector<8x8xf32>
    %16 = vector.broadcast %11 : vector<1x8xf32> to vector<8x8xf32>
    %17 = arith.addf %15, %16 : vector<8x8xf32>
    %cst_14 = arith.constant dense<0xFF800000> : vector<8xf32>
    %18 = vector.multi_reduction <maximumf>, %17, %cst_14 [1] : vector<8x8xf32> to vector<8xf32>
    %19 = vector.shape_cast %18 : vector<8xf32> to vector<8x1xf32>
    %20 = vector.broadcast %19 : vector<8x1xf32> to vector<8x8xf32>
    %21 = arith.subf %17, %20 : vector<8x8xf32>
    %22 = math.exp %21 : vector<8x8xf32>
    %cst_15 = arith.constant dense<0.000000e+00> : vector<8xf32>
    %23 = vector.multi_reduction <add>, %22, %cst_15 [1] : vector<8x8xf32> to vector<8xf32>
    %24 = vector.shape_cast %23 : vector<8xf32> to vector<8x1xf32>
    %cst_16 = arith.constant dense<0.000000e+00> : vector<8x8xf32>
    %25 = tpu.matmul %22, %14, %cst_16 {dimension_numbers = #tpu.dot_dimension_numbers<[1], [0], [0], [1], [0, 0, 1, 1], [], []>} : vector<8x8xf32>, vector<8x8xf32>, vector<8x8xf32> -> vector<8x8xf32>
    %26 = tpu.reciprocal %24 {approx = true} : vector<8x1xf32> -> vector<8x1xf32>
    %27 = vector.broadcast %26 : vector<8x1xf32> to vector<8x8xf32>
    %28 = arith.mulf %25, %27 : vector<8x8xf32>
    %c0_17 = arith.constant 0 : index
    %c0_18 = arith.constant 0 : index
    %c0_19 = arith.constant 0 : index
    %29 = vector.load %arg9[%c0_17, %c0_18, %c0_19] : memref<1x8x32xf32, #tpu.memory_space<vmem>>, vector<1x8x8xf32>
    %30 = vector.shape_cast %29 : vector<1x8x8xf32> to vector<8x8xf32>
    %31 = vector.shape_cast %28 : vector<8x8xf32> to vector<1x8x8xf32>
    tpu.vector_store %arg9[%c0_17, %c0_18, %c0_19], %31 {strides = array<i32>} : memref<1x8x32xf32, #tpu.memory_space<vmem>>, vector<1x8x8xf32>,
    %32 = vector.extract_strided_slice %9 {offsets = [0, 8], sizes = [8, 8], strides = [1, 1]} : vector<8x32xf32> to vector<8x8xf32>
    %c0_20 = arith.constant 0 : index
    %c8 = arith.constant 8 : index
    %33 = vector.load %arg10[%c0_20, %c8] : memref<8x64xf32, #tpu.memory_space<vmem>>, vector<8x8xf32>
    %c0_21 = arith.constant 0 : index
    %c40 = arith.constant 40 : index
    %34 = vector.load %arg10[%c0_21, %c40] : memref<8x64xf32, #tpu.memory_space<vmem>>, vector<8x8xf32>
    %cst_22 = arith.constant dense<0.000000e+00> : vector<8x8xf32>
    %35 = tpu.matmul %32, %33, %cst_22 {dimension_numbers = #tpu.dot_dimension_numbers<[1], [1], [0], [0], [0, 0, 1, 0], [], []>} : vector<8x8xf32>, vector<8x8xf32>, vector<8x8xf32> -> vector<8x8xf32>
    %36 = vector.broadcast %11 : vector<1x8xf32> to vector<8x8xf32>
    %37 = arith.addf %35, %36 : vector<8x8xf32>
    %cst_23 = arith.constant dense<0xFF800000> : vector<8xf32>
    %38 = vector.multi_reduction <maximumf>, %37, %cst_23 [1] : vector<8x8xf32> to vector<8xf32>
    %39 = vector.shape_cast %38 : vector<8xf32> to vector<8x1xf32>
    %40 = vector.broadcast %39 : vector<8x1xf32> to vector<8x8xf32>
    %41 = arith.subf %37, %40 : vector<8x8xf32>
    %42 = math.exp %41 : vector<8x8xf32>
    %cst_24 = arith.constant dense<0.000000e+00> : vector<8xf32>
    %43 = vector.multi_reduction <add>, %42, %cst_24 [1] : vector<8x8xf32> to vector<8xf32>
    %44 = vector.shape_cast %43 : vector<8xf32> to vector<8x1xf32>
    %cst_25 = arith.constant dense<0.000000e+00> : vector<8x8xf32>
    %45 = tpu.matmul %42, %34, %cst_25 {dimension_numbers = #tpu.dot_dimension_numbers<[1], [0], [0], [1], [0, 0, 1, 1], [], []>} : vector<8x8xf32>, vector<8x8xf32>, vector<8x8xf32> -> vector<8x8xf32>
    %46 = tpu.reciprocal %44 {approx = true} : vector<8x1xf32> -> vector<8x1xf32>
    %47 = vector.broadcast %46 : vector<8x1xf32> to vector<8x8xf32>
    %48 = arith.mulf %45, %47 : vector<8x8xf32>
    %c0_26 = arith.constant 0 : index
    %c0_27 = arith.constant 0 : index
    %c8_28 = arith.constant 8 : index
    %49 = vector.load %arg9[%c0_26, %c0_27, %c8_28] : memref<1x8x32xf32, #tpu.memory_space<vmem>>, vector<1x8x8xf32>
    %50 = vector.shape_cast %49 : vector<1x8x8xf32> to vector<8x8xf32>
    %51 = vector.shape_cast %48 : vector<8x8xf32> to vector<1x8x8xf32>
    tpu.vector_store %arg9[%c0_26, %c0_27, %c8_28], %51 {strides = array<i32>} : memref<1x8x32xf32, #tpu.memory_space<vmem>>, vector<1x8x8xf32>,
    %52 = vector.extract_strided_slice %9 {offsets = [0, 16], sizes = [8, 8], strides = [1, 1]} : vector<8x32xf32> to vector<8x8xf32>
    %c0_29 = arith.constant 0 : index
    %c16 = arith.constant 16 : index
    %53 = vector.load %arg10[%c0_29, %c16] : memref<8x64xf32, #tpu.memory_space<vmem>>, vector<8x8xf32>
    %c0_30 = arith.constant 0 : index
    %c48 = arith.constant 48 : index
    %54 = vector.load %arg10[%c0_30, %c48] : memref<8x64xf32, #tpu.memory_space<vmem>>, vector<8x8xf32>
    %cst_31 = arith.constant dense<0.000000e+00> : vector<8x8xf32>
    %55 = tpu.matmul %52, %53, %cst_31 {dimension_numbers = #tpu.dot_dimension_numbers<[1], [1], [0], [0], [0, 0, 1, 0], [], []>} : vector<8x8xf32>, vector<8x8xf32>, vector<8x8xf32> -> vector<8x8xf32>
    %56 = vector.broadcast %11 : vector<1x8xf32> to vector<8x8xf32>
    %57 = arith.addf %55, %56 : vector<8x8xf32>
    %cst_32 = arith.constant dense<0xFF800000> : vector<8xf32>
    %58 = vector.multi_reduction <maximumf>, %57, %cst_32 [1] : vector<8x8xf32> to vector<8xf32>
    %59 = vector.shape_cast %58 : vector<8xf32> to vector<8x1xf32>
    %60 = vector.broadcast %59 : vector<8x1xf32> to vector<8x8xf32>
    %61 = arith.subf %57, %60 : vector<8x8xf32>
    %62 = math.exp %61 : vector<8x8xf32>
    %cst_33 = arith.constant dense<0.000000e+00> : vector<8xf32>
    %63 = vector.multi_reduction <add>, %62, %cst_33 [1] : vector<8x8xf32> to vector<8xf32>
    %64 = vector.shape_cast %63 : vector<8xf32> to vector<8x1xf32>
    %cst_34 = arith.constant dense<0.000000e+00> : vector<8x8xf32>
    %65 = tpu.matmul %62, %54, %cst_34 {dimension_numbers = #tpu.dot_dimension_numbers<[1], [0], [0], [1], [0, 0, 1, 1], [], []>} : vector<8x8xf32>, vector<8x8xf32>, vector<8x8xf32> -> vector<8x8xf32>
    %66 = tpu.reciprocal %64 {approx = true} : vector<8x1xf32> -> vector<8x1xf32>
    %67 = vector.broadcast %66 : vector<8x1xf32> to vector<8x8xf32>
    %68 = arith.mulf %65, %67 : vector<8x8xf32>
    %c0_35 = arith.constant 0 : index
    %c0_36 = arith.constant 0 : index
    %c16_37 = arith.constant 16 : index
    %69 = vector.load %arg9[%c0_35, %c0_36, %c16_37] : memref<1x8x32xf32, #tpu.memory_space<vmem>>, vector<1x8x8xf32>
    %70 = vector.shape_cast %69 : vector<1x8x8xf32> to vector<8x8xf32>
    %71 = vector.shape_cast %68 : vector<8x8xf32> to vector<1x8x8xf32>
    tpu.vector_store %arg9[%c0_35, %c0_36, %c16_37], %71 {strides = array<i32>} : memref<1x8x32xf32, #tpu.memory_space<vmem>>, vector<1x8x8xf32>,
    %72 = vector.extract_strided_slice %9 {offsets = [0, 24], sizes = [8, 8], strides = [1, 1]} : vector<8x32xf32> to vector<8x8xf32>
    %c0_38 = arith.constant 0 : index
    %c24 = arith.constant 24 : index
    %73 = vector.load %arg10[%c0_38, %c24] : memref<8x64xf32, #tpu.memory_space<vmem>>, vector<8x8xf32>
    %c0_39 = arith.constant 0 : index
    %c56 = arith.constant 56 : index
    %74 = vector.load %arg10[%c0_39, %c56] : memref<8x64xf32, #tpu.memory_space<vmem>>, vector<8x8xf32>
    %cst_40 = arith.constant dense<0.000000e+00> : vector<8x8xf32>
    %75 = tpu.matmul %72, %73, %cst_40 {dimension_numbers = #tpu.dot_dimension_numbers<[1], [1], [0], [0], [0, 0, 1, 0], [], []>} : vector<8x8xf32>, vector<8x8xf32>, vector<8x8xf32> -> vector<8x8xf32>
    %76 = vector.broadcast %11 : vector<1x8xf32> to vector<8x8xf32>
    %77 = arith.addf %75, %76 : vector<8x8xf32>
    %cst_41 = arith.constant dense<0xFF800000> : vector<8xf32>
    %78 = vector.multi_reduction <maximumf>, %77, %cst_41 [1] : vector<8x8xf32> to vector<8xf32>
    %79 = vector.shape_cast %78 : vector<8xf32> to vector<8x1xf32>
    %80 = vector.broadcast %79 : vector<8x1xf32> to vector<8x8xf32>
    %81 = arith.subf %77, %80 : vector<8x8xf32>
    %82 = math.exp %81 : vector<8x8xf32>
    %cst_42 = arith.constant dense<0.000000e+00> : vector<8xf32>
    %83 = vector.multi_reduction <add>, %82, %cst_42 [1] : vector<8x8xf32> to vector<8xf32>
    %84 = vector.shape_cast %83 : vector<8xf32> to vector<8x1xf32>
    %cst_43 = arith.constant dense<0.000000e+00> : vector<8x8xf32>
    %85 = tpu.matmul %82, %74, %cst_43 {dimension_numbers = #tpu.dot_dimension_numbers<[1], [0], [0], [1], [0, 0, 1, 1], [], []>} : vector<8x8xf32>, vector<8x8xf32>, vector<8x8xf32> -> vector<8x8xf32>
    %86 = tpu.reciprocal %84 {approx = true} : vector<8x1xf32> -> vector<8x1xf32>
    %87 = vector.broadcast %86 : vector<8x1xf32> to vector<8x8xf32>
    %88 = arith.mulf %85, %87 : vector<8x8xf32>
    %c0_44 = arith.constant 0 : index
    %c0_45 = arith.constant 0 : index
    %c24_46 = arith.constant 24 : index
    %89 = vector.load %arg9[%c0_44, %c0_45, %c24_46] : memref<1x8x32xf32, #tpu.memory_space<vmem>>, vector<1x8x8xf32>
    %90 = vector.shape_cast %89 : vector<1x8x8xf32> to vector<8x8xf32>
    %91 = vector.shape_cast %88 : vector<8x8xf32> to vector<1x8x8xf32>
    tpu.vector_store %arg9[%c0_44, %c0_45, %c24_46], %91 {strides = array<i32>} : memref<1x8x32xf32, #tpu.memory_space<vmem>>, vector<1x8x8xf32>,
    return
  }
  func.func @transform_0(%arg0: i32, %arg1: i32) -> (i32, i32, i32) {
    %c0_i32 = arith.constant 0 : i32
    %c0_i32_0 = arith.constant 0 : i32
    return %arg0, %arg1, %c0_i32 : i32, i32, i32
  }
  func.func @transform_1(%arg0: i32, %arg1: i32) -> (i32, i32, i32) {
    %c0_i32 = arith.constant 0 : i32
    %c0_i32_0 = arith.constant 0 : i32
    %c0_i32_1 = arith.constant 0 : i32
    return %arg0, %c0_i32, %c0_i32_0 : i32, i32, i32
  }
  func.func @transform_2(%arg0: i32, %arg1: i32) -> (i32, i32, i32) {
    %c0_i32 = arith.constant 0 : i32
    %c0_i32_0 = arith.constant 0 : i32
    %c0_i32_1 = arith.constant 0 : i32
    return %arg0, %c0_i32, %c0_i32_0 : i32, i32, i32
  }
  func.func @transform_3(%arg0: i32, %arg1: i32) -> (i32, i32) {
    %c0_i32 = arith.constant 0 : i32
    %c0_i32_0 = arith.constant 0 : i32
    %c0_i32_1 = arith.constant 0 : i32
    return %c0_i32, %c0_i32_0 : i32, i32
  }
  func.func @transform_4(%arg0: i32, %arg1: i32) -> (i32, i32) {
    %c0_i32 = arith.constant 0 : i32
    %c0_i32_0 = arith.constant 0 : i32
    %c0_i32_1 = arith.constant 0 : i32
    return %c0_i32, %c0_i32_0 : i32, i32
  }
  func.func @transform_5(%arg0: i32, %arg1: i32) -> (i32, i32) {
    %c0_i32 = arith.constant 0 : i32
    %c0_i32_0 = arith.constant 0 : i32
    %c0_i32_1 = arith.constant 0 : i32
    return %c0_i32, %c0_i32_0 : i32, i32
  }
  func.func @transform_6(%arg0: i32, %arg1: i32) -> (i32, i32) {
    %c0_i32 = arith.constant 0 : i32
    %c0_i32_0 = arith.constant 0 : i32
    %c0_i32_1 = arith.constant 0 : i32
    return %c0_i32, %c0_i32_0 : i32, i32
  }
  func.func @transform_7(%arg0: i32, %arg1: i32) -> (i32, i32, i32) {
    %c0_i32 = arith.constant 0 : i32
    %c0_i32_0 = arith.constant 0 : i32
    return %arg0, %arg1, %c0_i32 : i32, i32, i32
  }
}

</mosaic_0001>

<llo_original>
// kernel: tpu_custom_call.1
$region0: #{tpu_custom_call.1}
  #allocation0 [shape = 'u32[]', space=smem, size = 0x4, offset = 0x4, fixed_abs, tag = 'smem constant byte address 0x4 - core index']
  #allocation1 [shape = 'u32[144,128]{1,0:T(1,128)}', space=vmem, size = 0x12000, scoped, tag = 'internal scratch']
  #allocation2 [shape = 'f32[8,64]{1,0:T(8,128)}', space=vmem, size = 0x1000, scoped, tag = 'scratch operand']
  %s0 = inlined_call_operand.hbm [shape: f32[2,8,32], index: 0, kind: input, shape index: {}]
  %s1 = inlined_call_operand.hbm [shape: f32[2,8,32], index: 1, kind: input, shape index: {}]
  %s2 = inlined_call_operand.vmem [shape: f32[2,1,8], index: 2, kind: input, shape index: {}]
  %s3 = inlined_call_operand.hbm [shape: f32[32,32], index: 3, kind: input, shape index: {}]
  %s4 = inlined_call_operand.hbm [shape: f32[32,64], index: 4, kind: input, shape index: {}]
  %s5 = inlined_call_operand.vmem [shape: f32[1,32], index: 5, kind: input, shape index: {}]
  %s6 = inlined_call_operand.vmem [shape: f32[1,64], index: 6, kind: input, shape index: {}]
  %s7 = inlined_call_operand.hbm [shape: f32[2,8,32], index: 7, kind: output, shape index: {}]
  %s8 = sld [smem:[#allocation0]]
  $region81: #{tpu_custom_call.1} parent=0
    _
  %s10 = ssub.s32 1, %s8
  %s11 = scalar_select 0, %s10, %s8
  $region1: #{tpu_custom_call.1} parent=0
    #allocation3 [shape = 'u8[8192]{0}', space=vmem, size = 0x2000, scoped, tag = 'input window, operand 0']
    #allocation4 [shape = 's32[2]{0}', space=sflag, size = 0x8, scoped, tag = 'scoped memory for tpu_custom_call.1']
    #allocation5 [shape = 's32[2]{0}', space=sflag, size = 0x8, scoped, tag = 'scoped memory for tpu_custom_call.1']
    #allocation6 [shape = 'u8[8192]{0}', space=vmem, size = 0x2000, scoped, tag = 'input window, operand 1']
    #allocation7 [shape = 's32[2]{0}', space=sflag, size = 0x8, scoped, tag = 'scoped memory for tpu_custom_call.1']
    #allocation8 [shape = 'u8[16384]{0}', space=vmem, size = 0x4000, scoped, tag = 'input window, operand 3, single buffered']
    #allocation9 [shape = 'u8[16384]{0}', space=vmem, size = 0x4000, scoped, tag = 'input window, operand 4, single buffered']
    #allocation10 [shape = 's32[1]{0}', space=sflag, size = 0x4, scoped, tag = 'scoped memory for tpu_custom_call.1']
    #allocation11 [shape = 'u8[8192]{0}', space=vmem, size = 0x2000, scoped, tag = 'output window, operand 0']
    %12 = vsyncpa [#allocation4], 0
    %s13 = scalar_lea.sflag [#allocation4], 1
    %14 = vsyncpa %s13, 0
    %15 = vsyncpa [#allocation7], 0
    %s16 = scalar_lea.sflag [#allocation7], 1
    %17 = vsyncpa %s16, 0
    %18 = vsyncpa [#allocation10], 0
    %19 = vsyncpa [#allocation5], 0
    %s20 = scalar_lea.sflag [#allocation5], 1
    %21 = vsyncpa %s20, 0
    loop: start=0, step=1, limit=4
    $region2: #{tpu_custom_call.1} parent=1 // loop_pre_header
      _
    $region3: #{tpu_custom_call.1} parent=1 // loop_header
      %s23 = sphi 0, %s27
      %p24 = scmp.ge.s32.totalorder %s23, 4
      %s30 = sphi 0, %s42
      %s31 = sphi 0, %s38
      %s32 = sphi 0, %s30
      %s33 = sphi 0, %s31
      %s34 = sphi 0, %s32
      %s35 = sphi 0, %s33
      %s47 = sphi 0, %s49
      %s50 = sphi 0, %s47
      %s51 = sphi 0, %s50
      %s67 = sphi 0, %s51
      %s73 = sphi 0, %s75
      %s76 = sphi 0, %s73
      %s77 = sphi 0, %s76
      %s93 = sphi 0, %s77
      %s99 = sphi 0, %s101
      %s102 = sphi 0, %s99
      %s103 = sphi 0, %s102
      %s119 = sphi 0, %s103
      %s123 = sphi 0, %s123
      %s125 = sphi 0, %s123
      %s126 = sphi 0, %s125
      %s140 = sphi 0, %s126
      %s144 = sphi 0, %s144
      %s146 = sphi 0, %s144
      %s147 = sphi 0, %s146
      %s161 = sphi 0, %s147
      %s165 = sphi 0, %s165
      %s167 = sphi 0, %s165
      %s168 = sphi 0, %s167
      %s182 = sphi 0, %s168
      %s186 = sphi 0, %s186
      %s188 = sphi 0, %s186
      %s189 = sphi 0, %s188
      %s203 = sphi 0, %s189
      %s211 = sphi 0, %s213
      %s214 = sphi 0, %s211
      %s215 = sphi 0, %s214
      %s231 = sphi 0, %s215
    $region4: #{tpu_custom_call.1} parent=1 // loop_header_branch
      %26 = sbr.rel (%p24) target = $region8
    $region5: #{tpu_custom_call.1} parent=1 // loop_body
      %s28 = ssub.s32 %s23, 1
      %s29 = ssub.s32 %s23, 2
      %s36 = sadd.s32 1, %s31
      %p37 = scmp.ge.s32.totalorder %s36, 1
      %s38 = scalar_select %p37, 0, %s36
      %s39 = sadd.s32 1, %s30
      %s40 = scalar_select %p37, %s39, %s30
      %p41 = scmp.ge.s32.totalorder %s40, 2
      %s42 = scalar_select %p41, 0, %s40
      %s43 = ssub.s32 %s30, %s42
      %s44 = ssub.s32 %s31, %s38
      %s45 = sor.u32 %s43, %s44
      %p46 = scmp.eq.s32.totalorder %s45, 0
      %s48 = sadd.s32 %s47, 1
      %s49 = scalar_select %p46, %s47, %s48
      %p52 = pneg %p46
      %p53 = scmp.eq.s32.totalorder %s23, 1
      %p54 = por %p52, %p53
      %p55 = scmp.ne.s32.totalorder %s47, %s50
      %p56 = scmp.eq.s32.totalorder %s23, 0
      %p57 = por %p55, %p56
      %p58 = scmp.ne.s32.totalorder %s47, %s50
      %p59 = scmp.eq.s32.totalorder %s28, 1
      %p60 = por %p58, %p59
      %p61 = scmp.ne.s32.totalorder %s50, %s51
      %p62 = scmp.eq.s32.totalorder %s28, 0
      %p63 = por %p61, %p62
      %p64 = scmp.ne.s32.totalorder %s50, %s51
      %p65 = scmp.eq.s32.totalorder %s29, 1
      %p66 = por %p64, %p65
      %p68 = scmp.ne.s32.totalorder %s51, %s67
      %p69 = scmp.eq.s32.totalorder %s29, 0
      %p70 = por %p68, %p69
      %s71 = ssub.s32 %s30, %s42
      %p72 = scmp.eq.s32.totalorder %s71, 0
      %s74 = sadd.s32 %s73, 1
      %s75 = scalar_select %p72, %s73, %s74
      %p78 = pneg %p72
      %p79 = scmp.eq.s32.totalorder %s23, 1
      %p80 = por %p78, %p79
      %p81 = scmp.ne.s32.totalorder %s73, %s76
      %p82 = scmp.eq.s32.totalorder %s23, 0
      %p83 = por %p81, %p82
      %p84 = scmp.ne.s32.totalorder %s73, %s76
      %p85 = scmp.eq.s32.totalorder %s28, 1
      %p86 = por %p84, %p85
      %p87 = scmp.ne.s32.totalorder %s76, %s77
      %p88 = scmp.eq.s32.totalorder %s28, 0
      %p89 = por %p87, %p88
      %p90 = scmp.ne.s32.totalorder %s76, %s77
      %p91 = scmp.eq.s32.totalorder %s29, 1
      %p92 = por %p90, %p91
      %p94 = scmp.ne.s32.totalorder %s77, %s93
      %p95 = scmp.eq.s32.totalorder %s29, 0
      %p96 = por %p94, %p95
      %s97 = ssub.s32 %s30, %s42
      %p98 = scmp.eq.s32.totalorder %s97, 0
      %s100 = sadd.s32 %s99, 1
      %s101 = scalar_select %p98, %s99, %s100
      %p104 = pneg %p98
      %p105 = scmp.eq.s32.totalorder %s23, 1
      %p106 = por %p104, %p105
      %p107 = scmp.ne.s32.totalorder %s99, %s102
      %p108 = scmp.eq.s32.totalorder %s23, 0
      %p109 = por %p107, %p108
      %p110 = scmp.ne.s32.totalorder %s99, %s102
      %p111 = scmp.eq.s32.totalorder %s28, 1
      %p112 = por %p110, %p111
      %p113 = scmp.ne.s32.totalorder %s102, %s103
      %p114 = scmp.eq.s32.totalorder %s28, 0
      %p115 = por %p113, %p114
      %p116 = scmp.ne.s32.totalorder %s102, %s103
      %p117 = scmp.eq.s32.totalorder %s29, 1
      %p118 = por %p116, %p117
      %p120 = scmp.ne.s32.totalorder %s103, %s119
      %p121 = scmp.eq.s32.totalorder %s29, 0
      %p122 = por %p120, %p121
      %s124 = sadd.s32 %s123, 1
      %p127 = scmp.eq.s32.totalorder %s23, 1
      %p128 = scmp.ne.s32.totalorder %s123, %s125
      %p129 = scmp.eq.s32.totalorder %s23, 0
      %p130 = por %p128, %p129
      %p131 = scmp.ne.s32.totalorder %s123, %s125
      %p132 = scmp.eq.s32.totalorder %s28, 1
      %p133 = por %p131, %p132
      %p134 = scmp.ne.s32.totalorder %s125, %s126
      %p135 = scmp.eq.s32.totalorder %s28, 0
      %p136 = por %p134, %p135
      %p137 = scmp.ne.s32.totalorder %s125, %s126
      %p138 = scmp.eq.s32.totalorder %s29, 1
      %p139 = por %p137, %p138
      %p141 = scmp.ne.s32.totalorder %s126, %s140
      %p142 = scmp.eq.s32.totalorder %s29, 0
      %p143 = por %p141, %p142
      %s145 = sadd.s32 %s144, 1
      %p148 = scmp.eq.s32.totalorder %s23, 1
      %p149 = scmp.ne.s32.totalorder %s144, %s146
      %p150 = scmp.eq.s32.totalorder %s23, 0
      %p151 = por %p149, %p150
      %p152 = scmp.ne.s32.totalorder %s144, %s146
      %p153 = scmp.eq.s32.totalorder %s28, 1
      %p154 = por %p152, %p153
      %p155 = scmp.ne.s32.totalorder %s146, %s147
      %p156 = scmp.eq.s32.totalorder %s28, 0
      %p157 = por %p155, %p156
      %p158 = scmp.ne.s32.totalorder %s146, %s147
      %p159 = scmp.eq.s32.totalorder %s29, 1
      %p160 = por %p158, %p159
      %p162 = scmp.ne.s32.totalorder %s147, %s161
      %p163 = scmp.eq.s32.totalorder %s29, 0
      %p164 = por %p162, %p163
      %s166 = sadd.s32 %s165, 1
      %p169 = scmp.eq.s32.totalorder %s23, 1
      %p170 = scmp.ne.s32.totalorder %s165, %s167
      %p171 = scmp.eq.s32.totalorder %s23, 0
      %p172 = por %p170, %p171
      %p173 = scmp.ne.s32.totalorder %s165, %s167
      %p174 = scmp.eq.s32.totalorder %s28, 1
      %p175 = por %p173, %p174
      %p176 = scmp.ne.s32.totalorder %s167, %s168
      %p177 = scmp.eq.s32.totalorder %s28, 0
      %p178 = por %p176, %p177
      %p179 = scmp.ne.s32.totalorder %s167, %s168
      %p180 = scmp.eq.s32.totalorder %s29, 1
      %p181 = por %p179, %p180
      %p183 = scmp.ne.s32.totalorder %s168, %s182
      %p184 = scmp.eq.s32.totalorder %s29, 0
      %p185 = por %p183, %p184
      %s187 = sadd.s32 %s186, 1
      %p190 = scmp.eq.s32.totalorder %s23, 1
      %p191 = scmp.ne.s32.totalorder %s186, %s188
      %p192 = scmp.eq.s32.totalorder %s23, 0
      %p193 = por %p191, %p192
      %p194 = scmp.ne.s32.totalorder %s186, %s188
      %p195 = scmp.eq.s32.totalorder %s28, 1
      %p196 = por %p194, %p195
      %p197 = scmp.ne.s32.totalorder %s188, %s189
      %p198 = scmp.eq.s32.totalorder %s28, 0
      %p199 = por %p197, %p198
      %p200 = scmp.ne.s32.totalorder %s188, %s189
      %p201 = scmp.eq.s32.totalorder %s29, 1
      %p202 = por %p200, %p201
      %p204 = scmp.ne.s32.totalorder %s189, %s203
      %p205 = scmp.eq.s32.totalorder %s29, 0
      %p206 = por %p204, %p205
      %s207 = ssub.s32 %s30, %s42
      %s208 = ssub.s32 %s31, %s38
      %s209 = sor.u32 %s207, %s208
      %p210 = scmp.eq.s32.totalorder %s209, 0
      %s212 = sadd.s32 %s211, 1
      %s213 = scalar_select %p210, %s211, %s212
      %p216 = pneg %p210
      %p217 = scmp.eq.s32.totalorder %s23, 1
      %p218 = por %p216, %p217
      %p219 = scmp.ne.s32.totalorder %s211, %s214
      %p220 = scmp.eq.s32.totalorder %s23, 0
      %p221 = por %p219, %p220
      %p222 = scmp.ne.s32.totalorder %s211, %s214
      %p223 = scmp.eq.s32.totalorder %s28, 1
      %p224 = por %p222, %p223
      %p225 = scmp.ne.s32.totalorder %s214, %s215
      %p226 = scmp.eq.s32.totalorder %s28, 0
      %p227 = por %p225, %p226
      %p228 = scmp.ne.s32.totalorder %s214, %s215
      %p229 = scmp.eq.s32.totalorder %s29, 1
      %p230 = por %p228, %p229
      %p232 = scmp.ne.s32.totalorder %s215, %s231
      %p233 = scmp.eq.s32.totalorder %s29, 0
      %p234 = por %p232, %p233
      %p235 = scmp.le.s32.totalorder 1, %s23
      %p236 = scmp.lt.s32.totalorder %s23, 3
      %p237 = pnand %p235, %p236
      %p238 = pneg %p237
      // Predicated region
      $region9: #{tpu_custom_call.1} parent=5 // pred_check
        _
      $region10: #{tpu_custom_call.1} parent=5 // pred_check_branch
        %240 = sbr.rel (%p237) target = $region12
      $region11: #{tpu_custom_call.1} parent=5 // pred_region
        %s241 = ssub.s32 %s23, 1
        // Predicated region
        $region13: #{tpu_custom_call.1} parent=11 // pred_check
          %p242 = pneg %p136
        $region14: #{tpu_custom_call.1} parent=11 // pred_check_branch
          %244 = sbr.rel (%p242) target = $region16
        $region15: #{tpu_custom_call.1} parent=11 // pred_region
          %s246 = ssub.s32 512, 512
          %247 = vsyncadd [#allocation7], %s246
          %s248 = sshll.u32 [#allocation8], 4
          %s249 = int_to_ptr.vmem [resolvable:$true] %s248
          %254 = dma.hbm_to_vmem [thread:$0]  %s3, 512, %s249, [#allocation7], 128, 128, 8
        $region16: #{tpu_custom_call.1} parent=11 // pred_fallthru
          _
        // Predicated region
        $region17: #{tpu_custom_call.1} parent=11 // pred_check
          %p255 = pneg %p157
        $region18: #{tpu_custom_call.1} parent=11 // pred_check_branch
          %257 = sbr.rel (%p255) target = $region20
        $region19: #{tpu_custom_call.1} parent=11 // pred_region
          %s259 = ssub.s32 512, 512
          %260 = vsyncadd [#allocation10], %s259
          %s261 = sshll.u32 [#allocation9], 4
          %s262 = int_to_ptr.vmem [resolvable:$true] %s261
          %267 = dma.hbm_to_vmem [thread:$0]  %s4, 512, %s262, [#allocation10], 128, 128, 8
        $region20: #{tpu_custom_call.1} parent=11 // pred_fallthru
          _
        // Predicated region
        $region21: #{tpu_custom_call.1} parent=11 // pred_check
          %p268 = pneg %p178
        $region22: #{tpu_custom_call.1} parent=11 // pred_check_branch
          %270 = sbr.rel (%p268) target = $region24
        $region23: #{tpu_custom_call.1} parent=11 // pred_region
          _
        $region24: #{tpu_custom_call.1} parent=11 // pred_fallthru
          _
        // Predicated region
        $region25: #{tpu_custom_call.1} parent=11 // pred_check
          %p271 = pneg %p199
        $region26: #{tpu_custom_call.1} parent=11 // pred_check_branch
          %273 = sbr.rel (%p271) target = $region28
        $region27: #{tpu_custom_call.1} parent=11 // pred_region
          _
        $region28: #{tpu_custom_call.1} parent=11 // pred_fallthru
          _
      $region12: #{tpu_custom_call.1} parent=5 // pred_fallthru
        _
      %p274 = scmp.lt.s32.totalorder %s23, 2
      // Predicated region
      $region29: #{tpu_custom_call.1} parent=5 // pred_check
        %p275 = pneg %p274
      $region30: #{tpu_custom_call.1} parent=5 // pred_check_branch
        %277 = sbr.rel (%p275) target = $region32
      $region31: #{tpu_custom_call.1} parent=5 // pred_region
        // Predicated region
        $region33: #{tpu_custom_call.1} parent=31 // pred_check
          %p278 = pneg %p57
        $region34: #{tpu_custom_call.1} parent=31 // pred_check_branch
          %280 = sbr.rel (%p278) target = $region36
        $region35: #{tpu_custom_call.1} parent=31 // pred_region
          %s281 = sand.u32 %s47, 1
          %s282 = scalar_lea.sflag [#allocation4], %s281
          %s283 = sand.u32 %s47, 1
          %s284 = smul.addr %s283, 8
          %s285 = scalar_lea.vmem [#allocation3], %s284
          %s287 = ssub.s32 128, 128
          %288 = vsyncadd %s282, %s287
          %s289 = sadd.s32 %s31, %s30
          %s290 = smul.addr %s289, 128
          %s291 = scalar_lea.hbm %s0, %s290
          %s293 = sshll.u32 %s285, 4
          %s294 = int_to_ptr.vmem [resolvable:$true] %s293
          %296 = dma.hbm_to_vmem [thread:$0]  %s291, 128, %s294, %s282
        $region36: #{tpu_custom_call.1} parent=31 // pred_fallthru
          _
        // Predicated region
        $region37: #{tpu_custom_call.1} parent=31 // pred_check
          %p297 = pneg %p83
        $region38: #{tpu_custom_call.1} parent=31 // pred_check_branch
          %299 = sbr.rel (%p297) target = $region40
        $region39: #{tpu_custom_call.1} parent=31 // pred_region
          %s300 = sand.u32 %s23, 1
          %s301 = scalar_lea.sflag [#allocation7], %s300
          %s302 = sand.u32 %s73, 1
          %s303 = smul.addr %s302, 8
          %s304 = scalar_lea.vmem [#allocation6], %s303
          %s306 = ssub.s32 128, 128
          %307 = vsyncadd %s301, %s306
          %s308 = smul.addr %s30, 128
          %s309 = scalar_lea.hbm %s1, %s308
          %s311 = sshll.u32 %s304, 4
          %s312 = int_to_ptr.vmem [resolvable:$true] %s311
          %314 = dma.hbm_to_vmem [thread:$0]  %s309, 128, %s312, %s301
        $region40: #{tpu_custom_call.1} parent=31 // pred_fallthru
          _
        // Predicated region
        $region41: #{tpu_custom_call.1} parent=31 // pred_check
          %p315 = pneg %p109
        $region42: #{tpu_custom_call.1} parent=31 // pred_check_branch
          %317 = sbr.rel (%p315) target = $region44
        $region43: #{tpu_custom_call.1} parent=31 // pred_region
          %p318 = scmp.lt.s32.totalorder %s30, 1
          %s319 = scalar_select %p318, %s30, 1
          %s320 = scalar_lea.vmem %s2, %s319
        $region44: #{tpu_custom_call.1} parent=31 // pred_fallthru
          _
      $region32: #{tpu_custom_call.1} parent=5 // pred_fallthru
        _
      %p321 = scmp.le.s32.totalorder 1, %s23
      %p322 = scmp.lt.s32.totalorder %s23, 3
      %p323 = pnand %p321, %p322
      %p324 = pneg %p323
      // Predicated region
      $region45: #{tpu_custom_call.1} parent=5 // pred_check
        _
      $region46: #{tpu_custom_call.1} parent=5 // pred_check_branch
        %326 = sbr.rel (%p323) target = $region48
      $region47: #{tpu_custom_call.1} parent=5 // pred_region
        %s327 = ssub.s32 %s23, 1
        %s328 = sand.u32 %s50, 1
        %s329 = scalar_lea.sflag [#allocation4], %s328
        %s330 = sand.u32 %s50, 1
        %s331 = smul.addr %s330, 8
        %s332 = scalar_lea.vmem [#allocation3], %s331
        // Predicated region
        $region49: #{tpu_custom_call.1} parent=47 // pred_check
          %p333 = pneg %p63
        $region50: #{tpu_custom_call.1} parent=47 // pred_check_branch
          %335 = sbr.rel (%p333) target = $region52
        $region51: #{tpu_custom_call.1} parent=47 // pred_region
          %336 = dma.done %s329, 128
        $region52: #{tpu_custom_call.1} parent=47 // pred_fallthru
          _
        %s337 = sand.u32 %s28, 1
        %s338 = scalar_lea.sflag [#allocation7], %s337
        %s339 = sand.u32 %s76, 1
        %s340 = smul.addr %s339, 8
        %s341 = scalar_lea.vmem [#allocation6], %s340
        // Predicated region
        $region53: #{tpu_custom_call.1} parent=47 // pred_check
          %p342 = pneg %p89
        $region54: #{tpu_custom_call.1} parent=47 // pred_check_branch
          %344 = sbr.rel (%p342) target = $region56
        $region55: #{tpu_custom_call.1} parent=47 // pred_region
          %345 = dma.done %s338, 128
        $region56: #{tpu_custom_call.1} parent=47 // pred_fallthru
          _
        // Predicated region
        $region57: #{tpu_custom_call.1} parent=47 // pred_check
          %p346 = pneg %p136
        $region58: #{tpu_custom_call.1} parent=47 // pred_check_branch
          %348 = sbr.rel (%p346) target = $region60
        $region59: #{tpu_custom_call.1} parent=47 // pred_region
          %349 = dma.done [#allocation7], 512
        $region60: #{tpu_custom_call.1} parent=47 // pred_fallthru
          _
        // Predicated region
        $region61: #{tpu_custom_call.1} parent=47 // pred_check
          %p350 = pneg %p157
        $region62: #{tpu_custom_call.1} parent=47 // pred_check_branch
          %352 = sbr.rel (%p350) target = $region64
        $region63: #{tpu_custom_call.1} parent=47 // pred_region
          %353 = dma.done [#allocation10], 512
        $region64: #{tpu_custom_call.1} parent=47 // pred_fallthru
          _
        %s354 = sand.u32 %s50, 1
        %s355 = scalar_lea.sflag [#allocation4], %s354
        %s356 = sand.u32 %s50, 1
        %s357 = smul.addr %s356, 8
        %s358 = scalar_lea.vmem [#allocation3], %s357
        %p359 = pneg %p63
        %p360 = pneg %p60
        %s361 = sand.u32 %s28, 1
        %s362 = scalar_lea.sflag [#allocation7], %s361
        %s363 = sand.u32 %s76, 1
        %s364 = smul.addr %s363, 8
        %s365 = scalar_lea.vmem [#allocation6], %s364
        %p366 = pneg %p89
        %p367 = pneg %p86
        %p368 = scmp.lt.s32.totalorder %s32, 1
        %s369 = scalar_select %p368, %s32, 1
        %s370 = scalar_lea.vmem %s2, %s369
        %p371 = pneg %p115
        %p372 = pneg %p112
        %p373 = pneg %p136
        %p374 = pneg %p133
        %p375 = pneg %p157
        %p376 = pneg %p154
        %p377 = pneg %p178
        %p378 = pneg %p175
        %p379 = pneg %p199
        %p380 = pneg %p196
        %p381 = pneg %p227
        %p382 = pneg %p224
        %s383 = sand.u32 %s214, 1
        %s384 = scalar_lea.sflag [#allocation5], %s383
        %s385 = sand.u32 %s214, 1
        %s386 = smul.addr %s385, 8
        %s387 = scalar_lea.vmem [#allocation11], %s386
        %p388 = scmp.lt.s32.totalorder %s32, 1
        %s389 = scalar_select %p388, %s32, 1
        %s390 = scalar_lea.vmem %s2, %s389
        %p391 = scmp.eq.s32.totalorder %s33, 0
        // Predicated region
        $region65: #{tpu_custom_call.1} parent=47 // pred_check
          %p392 = pneg %p391
        $region66: #{tpu_custom_call.1} parent=47 // pred_check_branch
          %394 = sbr.rel (%p392) target = $region68
        $region67: #{tpu_custom_call.1} parent=47 // pred_region
          %v395 = vld [vmem:[%s341] sm:$0xff]
          %v396 = vld [vmem:[#allocation9] sm:$0xff]
          %v397 = vld [vmem:[#allocation9 + $0x8] sm:$0xff]
          %v398 = vld [vmem:[#allocation9 + $0x10] sm:$0xff]
          %v399 = vld [vmem:[#allocation9 + $0x18] sm:$0xff]
          %v400 = vld [vmem:[%s6] sm:$0x1]
          %v402 = vlaneseq
          %v403 = vshrl.u32 %v402, 7
          %v404 = vsub.s32 0, %v403
          %v405 = vrot.slane %v400, %v404
          %vm407 = vcmask 261120
          %v409 = vsel %vm407, %v395, 0
          %411 = vmatprep.subr.mxu0 0.0
          %412 = vmatpush1.msra.mxu0 0.0
          %413 = vmatprep.subr.mxu0 0.0
          %414 = vmatpush1.msra.mxu0 0.0
          %415 = vmatprep.subr.mxu0 0.0
          %416 = vmatpush1.msra.mxu0 0.0
          %417 = vmatprep.subr.mxu0 0.0
          %418 = vmatpush1.msra.mxu0 0.0
          %419 = vmatprep.subr.mxu0 0.0
          %420 = vmatpush1.msra.mxu0 0.0
          %421 = vmatprep.subr.mxu0 0.0
          %422 = vmatpush1.msra.mxu0 0.0
          %423 = vmatprep.subr.mxu0 0.0
          %424 = vmatpush1.msra.mxu0 0.0
          %425 = vmatprep.subr.mxu0 0.0
          %426 = vmatpush1.msra.mxu0 0.0
          %427 = vmatprep.subr.mxu0 0.0
          %428 = vmatpush1.msra.mxu0 0.0
          %429 = vmatprep.subr.mxu0 0.0
          %430 = vmatpush1.msra.mxu0 0.0
          %431 = vmatprep.subr.mxu0 0.0
          %432 = vmatpush1.msra.mxu0 0.0
          %433 = vmatprep.subr.mxu0 0.0
          %434 = vmatpush1.msra.mxu0 0.0
          %435 = vmatprep.subr.mxu0 0.0
          %436 = vmatpush1.msra.mxu0 %v399
          %437 = vmatprep.subr.mxu0 0.0
          %438 = vmatpush1.msra.mxu0 %v398
          %439 = vmatprep.subr.mxu0 0.0
          %440 = vmatpush1.msra.mxu0 %v397
          %441 = vmatprep.subr.mxu0 0.0
          %442 = vmatpush1.msra.mxu0 %v396
          %443 = vmatprep.subr.mxu0 0.0
          %444 = vmatpush2.msra.mxu0 0.0
          %445 = vmatprep.subr.mxu0 0.0
          %446 = vmatpush2.msra.mxu0 0.0
          %447 = vmatprep.subr.mxu0 0.0
          %448 = vmatpush2.msra.mxu0 0.0
          %449 = vmatprep.subr.mxu0 0.0
          %450 = vmatpush2.msra.mxu0 0.0
          %451 = vmatprep.subr.mxu0 0.0
          %452 = vmatpush2.msra.mxu0 0.0
          %453 = vmatprep.subr.mxu0 0.0
          %454 = vmatpush2.msra.mxu0 0.0
          %455 = vmatprep.subr.mxu0 0.0
          %456 = vmatpush2.msra.mxu0 0.0
          %457 = vmatprep.subr.mxu0 0.0
          %458 = vmatpush2.msra.mxu0 0.0
          %459 = vmatprep.subr.mxu0 0.0
          %460 = vmatpush2.msra.mxu0 0.0
          %461 = vmatprep.subr.mxu0 0.0
          %462 = vmatpush2.msra.mxu0 0.0
          %463 = vmatprep.subr.mxu0 0.0
          %464 = vmatpush2.msra.mxu0 0.0
          %465 = vmatprep.subr.mxu0 0.0
          %466 = vmatpush2.msra.mxu0 0.0
          %467 = vmatprep.subr.mxu0 0.0
          %468 = vmatpush2.msra.mxu0 0.0
          %469 = vmatprep.subr.mxu0 0.0
          %470 = vmatpush2.msra.mxu0 0.0
          %471 = vmatprep.subr.mxu0 0.0
          %472 = vmatpush2.msra.mxu0 0.0
          %473 = vmatprep.subr.mxu0 0.0
          %474 = vmatpush2.msra.mxu0 0.0
          %475 = vmatprep.mubr.f32.mxu0 0.0
          %476 = vmatmul.mubr.f32.gmra.mxu0 %v409
          %v477 = vpop.f32.mrf.mxu0
          %v478 = vadd.f32 %v405, %v477
          %v479 = vpop.f32.mrf.mxu0
          %480 = vdwg.mxu0
          %481 = vst.msk [vmem:[#allocation2] sm:$0xff] %vm407, %v478
          %v482 = vld [vmem:[#allocation9] sm:$0xff]
          %v483 = vld [vmem:[#allocation9 + $0x8] sm:$0xff]
          %v484 = vld [vmem:[#allocation9 + $0x10] sm:$0xff]
          %v485 = vld [vmem:[#allocation9 + $0x18] sm:$0xff]
          %v486 = vld [vmem:[%s6] sm:$0x1]
          %v488 = vlaneseq
          %v489 = vshrl.u32 %v488, 7
          %v490 = vsub.s32 0, %v489
          %v491 = vrot.slane %v486, %v490
          %496 = vrot.lane.b32.xlu0 %v482, 96
          %v497 = vpop.permute.xlu0 %496
          %498 = vrot.lane.b32.xlu0 %v483, 96
          %v499 = vpop.permute.xlu0 %498
          %500 = vrot.lane.b32.xlu0 %v484, 96
          %v501 = vpop.permute.xlu0 %500
          %502 = vrot.lane.b32.xlu0 %v485, 96
          %v503 = vpop.permute.xlu0 %502
          %508 = vrot.lane.b32.xlu0 %v491, 96
          %v509 = vpop.permute.xlu0 %508
          %511 = vmatprep.subr.mxu0 0.0
          %512 = vmatpush1.msra.mxu0 0.0
          %513 = vmatprep.subr.mxu0 0.0
          %514 = vmatpush1.msra.mxu0 0.0
          %515 = vmatprep.subr.mxu0 0.0
          %516 = vmatpush1.msra.mxu0 0.0
          %517 = vmatprep.subr.mxu0 0.0
          %518 = vmatpush1.msra.mxu0 0.0
          %519 = vmatprep.subr.mxu0 0.0
          %520 = vmatpush1.msra.mxu0 0.0
          %521 = vmatprep.subr.mxu0 0.0
          %522 = vmatpush1.msra.mxu0 0.0
          %523 = vmatprep.subr.mxu0 0.0
          %524 = vmatpush1.msra.mxu0 0.0
          %525 = vmatprep.subr.mxu0 0.0
          %526 = vmatpush1.msra.mxu0 0.0
          %527 = vmatprep.subr.mxu0 0.0
          %528 = vmatpush1.msra.mxu0 0.0
          %529 = vmatprep.subr.mxu0 0.0
          %530 = vmatpush1.msra.mxu0 0.0
          %531 = vmatprep.subr.mxu0 0.0
          %532 = vmatpush1.msra.mxu0 0.0
          %533 = vmatprep.subr.mxu0 0.0
          %534 = vmatpush1.msra.mxu0 0.0
          %535 = vmatprep.subr.mxu0 0.0
          %536 = vmatpush1.msra.mxu0 %v503
          %537 = vmatprep.subr.mxu0 0.0
          %538 = vmatpush1.msra.mxu0 %v501
          %539 = vmatprep.subr.mxu0 0.0
          %540 = vmatpush1.msra.mxu0 %v499
          %541 = vmatprep.subr.mxu0 0.0
          %542 = vmatpush1.msra.mxu0 %v497
          %543 = vmatprep.subr.mxu0 0.0
          %544 = vmatpush2.msra.mxu0 0.0
          %545 = vmatprep.subr.mxu0 0.0
          %546 = vmatpush2.msra.mxu0 0.0
          %547 = vmatprep.subr.mxu0 0.0
          %548 = vmatpush2.msra.mxu0 0.0
          %549 = vmatprep.subr.mxu0 0.0
          %550 = vmatpush2.msra.mxu0 0.0
          %551 = vmatprep.subr.mxu0 0.0
          %552 = vmatpush2.msra.mxu0 0.0
          %553 = vmatprep.subr.mxu0 0.0
          %554 = vmatpush2.msra.mxu0 0.0
          %555 = vmatprep.subr.mxu0 0.0
          %556 = vmatpush2.msra.mxu0 0.0
          %557 = vmatprep.subr.mxu0 0.0
          %558 = vmatpush2.msra.mxu0 0.0
          %559 = vmatprep.subr.mxu0 0.0
          %560 = vmatpush2.msra.mxu0 0.0
          %561 = vmatprep.subr.mxu0 0.0
          %562 = vmatpush2.msra.mxu0 0.0
          %563 = vmatprep.subr.mxu0 0.0
          %564 = vmatpush2.msra.mxu0 0.0
          %565 = vmatprep.subr.mxu0 0.0
          %566 = vmatpush2.msra.mxu0 0.0
          %567 = vmatprep.subr.mxu0 0.0
          %568 = vmatpush2.msra.mxu0 0.0
          %569 = vmatprep.subr.mxu0 0.0
          %570 = vmatpush2.msra.mxu0 0.0
          %571 = vmatprep.subr.mxu0 0.0
          %572 = vmatpush2.msra.mxu0 0.0
          %573 = vmatprep.subr.mxu0 0.0
          %574 = vmatpush2.msra.mxu0 0.0
          %575 = vmatprep.mubr.f32.mxu0 0.0
          %576 = vmatmul.mubr.f32.gmra.mxu0 %v409
          %v577 = vpop.f32.mrf.mxu0
          %v578 = vadd.f32 %v509, %v577
          %v579 = vpop.f32.mrf.mxu0
          %580 = vdwg.mxu0
          %582 = vrot.lane.b32.xlu0 %v578, 32
          %v583 = vpop.permute.xlu0 %582
          %vm585 = vcmask 523520
          %586 = vst.msk [vmem:[#allocation2] sm:$0xff] %vm585, %v583
        $region68: #{tpu_custom_call.1} parent=47 // pred_fallthru
          _
        %v587 = vld [vmem:[%s332] sm:$0xff]
        %v588 = vld [vmem:[#allocation8] sm:$0xff]
        %v589 = vld [vmem:[#allocation8 + $0x8] sm:$0xff]
        %v590 = vld [vmem:[#allocation8 + $0x10] sm:$0xff]
        %v591 = vld [vmem:[#allocation8 + $0x18] sm:$0xff]
        %v592 = vld [vmem:[%s5] sm:$0x1]
        %v594 = vlaneseq
        %v595 = vshrl.u32 %v594, 7
        %v596 = vsub.s32 0, %v595
        %v597 = vrot.slane %v592, %v596
        %vm599 = vcmask 261120
        %v601 = vsel %vm599, %v587, 0
        %603 = vmatprep.subr.mxu0 0.0
        %604 = vmatpush1.msra.mxu0 0.0
        %605 = vmatprep.subr.mxu0 0.0
        %606 = vmatpush1.msra.mxu0 0.0
        %607 = vmatprep.subr.mxu0 0.0
        %608 = vmatpush1.msra.mxu0 0.0
        %609 = vmatprep.subr.mxu0 0.0
        %610 = vmatpush1.msra.mxu0 0.0
        %611 = vmatprep.subr.mxu0 0.0
        %612 = vmatpush1.msra.mxu0 0.0
        %613 = vmatprep.subr.mxu0 0.0
        %614 = vmatpush1.msra.mxu0 0.0
        %615 = vmatprep.subr.mxu0 0.0
        %616 = vmatpush1.msra.mxu0 0.0
        %617 = vmatprep.subr.mxu0 0.0
        %618 = vmatpush1.msra.mxu0 0.0
        %619 = vmatprep.subr.mxu0 0.0
        %620 = vmatpush1.msra.mxu0 0.0
        %621 = vmatprep.subr.mxu0 0.0
        %622 = vmatpush1.msra.mxu0 0.0
        %623 = vmatprep.subr.mxu0 0.0
        %624 = vmatpush1.msra.mxu0 0.0
        %625 = vmatprep.subr.mxu0 0.0
        %626 = vmatpush1.msra.mxu0 0.0
        %627 = vmatprep.subr.mxu0 0.0
        %628 = vmatpush1.msra.mxu0 %v591
        %629 = vmatprep.subr.mxu0 0.0
        %630 = vmatpush1.msra.mxu0 %v590
        %631 = vmatprep.subr.mxu0 0.0
        %632 = vmatpush1.msra.mxu0 %v589
        %633 = vmatprep.subr.mxu0 0.0
        %634 = vmatpush1.msra.mxu0 %v588
        %635 = vmatprep.subr.mxu0 0.0
        %636 = vmatpush2.msra.mxu0 0.0
        %637 = vmatprep.subr.mxu0 0.0
        %638 = vmatpush2.msra.mxu0 0.0
        %639 = vmatprep.subr.mxu0 0.0
        %640 = vmatpush2.msra.mxu0 0.0
        %641 = vmatprep.subr.mxu0 0.0
        %642 = vmatpush2.msra.mxu0 0.0
        %643 = vmatprep.subr.mxu0 0.0
        %644 = vmatpush2.msra.mxu0 0.0
        %645 = vmatprep.subr.mxu0 0.0
        %646 = vmatpush2.msra.mxu0 0.0
        %647 = vmatprep.subr.mxu0 0.0
        %648 = vmatpush2.msra.mxu0 0.0
        %649 = vmatprep.subr.mxu0 0.0
        %650 = vmatpush2.msra.mxu0 0.0
        %651 = vmatprep.subr.mxu0 0.0
        %652 = vmatpush2.msra.mxu0 0.0
        %653 = vmatprep.subr.mxu0 0.0
        %654 = vmatpush2.msra.mxu0 0.0
        %655 = vmatprep.subr.mxu0 0.0
        %656 = vmatpush2.msra.mxu0 0.0
        %657 = vmatprep.subr.mxu0 0.0
        %658 = vmatpush2.msra.mxu0 0.0
        %659 = vmatprep.subr.mxu0 0.0
        %660 = vmatpush2.msra.mxu0 0.0
        %661 = vmatprep.subr.mxu0 0.0
        %662 = vmatpush2.msra.mxu0 0.0
        %663 = vmatprep.subr.mxu0 0.0
        %664 = vmatpush2.msra.mxu0 0.0
        %665 = vmatprep.subr.mxu0 0.0
        %666 = vmatpush2.msra.mxu0 0.0
        %667 = vmatprep.mubr.f32.mxu0 0.0
        %668 = vmatmul.mubr.f32.gmra.mxu0 %v601
        %v669 = vpop.f32.mrf.mxu0
        %v670 = vadd.f32 %v597, %v669
        %v671 = vpop.f32.mrf.mxu0
        %672 = vdwg.mxu0
        %v673 = vld [vmem:[%s390] sm:$0x1]
        %v674 = vld [vmem:[#allocation2] sm:$0xff]
        %v676 = vlaneseq
        %v677 = vshrl.u32 %v676, 7
        %v678 = vsub.s32 0, %v677
        %v679 = vrot.slane %v673, %v678
        %vm681 = vcmask 64512
        %v683 = vsel %vm681, %v670, 0
        %v686 = vsel %vm681, %v674, 0
        %688 = vmatprep.subr.mxu0 0.0
        %689 = vmatpush1.xpose.msra.mxu0 0.0
        %690 = vmatprep.subr.mxu0 0.0
        %691 = vmatpush1.xpose.msra.mxu0 0.0
        %692 = vmatprep.subr.mxu0 0.0
        %693 = vmatpush1.xpose.msra.mxu0 0.0
        %694 = vmatprep.subr.mxu0 0.0
        %695 = vmatpush1.xpose.msra.mxu0 0.0
        %696 = vmatprep.subr.mxu0 0.0
        %697 = vmatpush1.xpose.msra.mxu0 0.0
        %698 = vmatprep.subr.mxu0 0.0
        %699 = vmatpush1.xpose.msra.mxu0 0.0
        %700 = vmatprep.subr.mxu0 0.0
        %701 = vmatpush1.xpose.msra.mxu0 0.0
        %702 = vmatprep.subr.mxu0 0.0
        %703 = vmatpush1.xpose.msra.mxu0 0.0
        %704 = vmatprep.subr.mxu0 0.0
        %705 = vmatpush1.xpose.msra.mxu0 0.0
        %706 = vmatprep.subr.mxu0 0.0
        %707 = vmatpush1.xpose.msra.mxu0 0.0
        %708 = vmatprep.subr.mxu0 0.0
        %709 = vmatpush1.xpose.msra.mxu0 0.0
        %710 = vmatprep.subr.mxu0 0.0
        %711 = vmatpush1.xpose.msra.mxu0 0.0
        %712 = vmatprep.subr.mxu0 0.0
        %713 = vmatpush1.xpose.msra.mxu0 0.0
        %714 = vmatprep.subr.mxu0 0.0
        %715 = vmatpush1.xpose.msra.mxu0 0.0
        %716 = vmatprep.subr.mxu0 0.0
        %717 = vmatpush1.xpose.msra.mxu0 0.0
        %718 = vmatprep.subr.mxu0 0.0
        %719 = vmatpush1.xpose.msra.mxu0 %v686
        %720 = vmatprep.subr.mxu0 0.0
        %721 = vmatpush2.xpose.msra.mxu0 0.0
        %722 = vmatprep.subr.mxu0 0.0
        %723 = vmatpush2.xpose.msra.mxu0 0.0
        %724 = vmatprep.subr.mxu0 0.0
        %725 = vmatpush2.xpose.msra.mxu0 0.0
        %726 = vmatprep.subr.mxu0 0.0
        %727 = vmatpush2.xpose.msra.mxu0 0.0
        %728 = vmatprep.subr.mxu0 0.0
        %729 = vmatpush2.xpose.msra.mxu0 0.0
        %730 = vmatprep.subr.mxu0 0.0
        %731 = vmatpush2.xpose.msra.mxu0 0.0
        %732 = vmatprep.subr.mxu0 0.0
        %733 = vmatpush2.xpose.msra.mxu0 0.0
        %734 = vmatprep.subr.mxu0 0.0
        %735 = vmatpush2.xpose.msra.mxu0 0.0
        %736 = vmatprep.subr.mxu0 0.0
        %737 = vmatpush2.xpose.msra.mxu0 0.0
        %738 = vmatprep.subr.mxu0 0.0
        %739 = vmatpush2.xpose.msra.mxu0 0.0
        %740 = vmatprep.subr.mxu0 0.0
        %741 = vmatpush2.xpose.msra.mxu0 0.0
        %742 = vmatprep.subr.mxu0 0.0
        %743 = vmatpush2.xpose.msra.mxu0 0.0
        %744 = vmatprep.subr.mxu0 0.0
        %745 = vmatpush2.xpose.msra.mxu0 0.0
        %746 = vmatprep.subr.mxu0 0.0
        %747 = vmatpush2.xpose.msra.mxu0 0.0
        %748 = vmatprep.subr.mxu0 0.0
        %749 = vmatpush2.xpose.msra.mxu0 0.0
        %750 = vmatprep.subr.mxu0 0.0
        %751 = vmatpush2.xpose.msra.mxu0 0.0
        %752 = vmatprep.mubr.f32.mxu0 0.0
        %753 = vmatmul.mubr.f32.gmra.mxu0 %v683
        %v754 = vpop.f32.mrf.mxu0
        %v755 = vadd.f32 %v679, %v754
        %v756 = vpop.f32.mrf.mxu0
        %757 = vdwg.mxu0
        %v758 = vsel %vm681, %v755, -inf
        %759 = vmax.xlane.f32.xlu0 %v758
        %v760 = vpop.xlane.xlu0 %759
        %v761 = vsub.f32 %v755, %v760
        %v762 = vmul.f32 %v761, 1.442695
        %v763 = vpow.pop %v762
        %v764 = vsel %vm681, %v763, 0.0
        %765 = vadd.xlane.f32.xlu0 %v764
        %v766 = vpop.xlane.xlu0 %765
        %767 = vrot.lane.b32.xlu0 %v674, 96
        %v768 = vpop.permute.xlu0 %767
        %v771 = vsel %vm681, %v763, 0
        %773 = vmatprep.subr.mxu0 0.0
        %774 = vmatpush1.msra.mxu0 0.0
        %775 = vmatprep.subr.mxu0 0.0
        %776 = vmatpush1.msra.mxu0 0.0
        %777 = vmatprep.subr.mxu0 0.0
        %778 = vmatpush1.msra.mxu0 0.0
        %779 = vmatprep.subr.mxu0 0.0
        %780 = vmatpush1.msra.mxu0 0.0
        %781 = vmatprep.subr.mxu0 0.0
        %782 = vmatpush1.msra.mxu0 0.0
        %783 = vmatprep.subr.mxu0 0.0
        %784 = vmatpush1.msra.mxu0 0.0
        %785 = vmatprep.subr.mxu0 0.0
        %786 = vmatpush1.msra.mxu0 0.0
        %787 = vmatprep.subr.mxu0 0.0
        %788 = vmatpush1.msra.mxu0 0.0
        %789 = vmatprep.subr.mxu0 0.0
        %790 = vmatpush1.msra.mxu0 0.0
        %791 = vmatprep.subr.mxu0 0.0
        %792 = vmatpush1.msra.mxu0 0.0
        %793 = vmatprep.subr.mxu0 0.0
        %794 = vmatpush1.msra.mxu0 0.0
        %795 = vmatprep.subr.mxu0 0.0
        %796 = vmatpush1.msra.mxu0 0.0
        %797 = vmatprep.subr.mxu0 0.0
        %798 = vmatpush1.msra.mxu0 0.0
        %799 = vmatprep.subr.mxu0 0.0
        %800 = vmatpush1.msra.mxu0 0.0
        %801 = vmatprep.subr.mxu0 0.0
        %802 = vmatpush1.msra.mxu0 0.0
        %803 = vmatprep.subr.mxu0 0.0
        %804 = vmatpush1.msra.mxu0 %v768
        %805 = vmatprep.subr.mxu0 0.0
        %806 = vmatpush2.msra.mxu0 0.0
        %807 = vmatprep.subr.mxu0 0.0
        %808 = vmatpush2.msra.mxu0 0.0
        %809 = vmatprep.subr.mxu0 0.0
        %810 = vmatpush2.msra.mxu0 0.0
        %811 = vmatprep.subr.mxu0 0.0
        %812 = vmatpush2.msra.mxu0 0.0
        %813 = vmatprep.subr.mxu0 0.0
        %814 = vmatpush2.msra.mxu0 0.0
        %815 = vmatprep.subr.mxu0 0.0
        %816 = vmatpush2.msra.mxu0 0.0
        %817 = vmatprep.subr.mxu0 0.0
        %818 = vmatpush2.msra.mxu0 0.0
        %819 = vmatprep.subr.mxu0 0.0
        %820 = vmatpush2.msra.mxu0 0.0
        %821 = vmatprep.subr.mxu0 0.0
        %822 = vmatpush2.msra.mxu0 0.0
        %823 = vmatprep.subr.mxu0 0.0
        %824 = vmatpush2.msra.mxu0 0.0
        %825 = vmatprep.subr.mxu0 0.0
        %826 = vmatpush2.msra.mxu0 0.0
        %827 = vmatprep.subr.mxu0 0.0
        %828 = vmatpush2.msra.mxu0 0.0
        %829 = vmatprep.subr.mxu0 0.0
        %830 = vmatpush2.msra.mxu0 0.0
        %831 = vmatprep.subr.mxu0 0.0
        %832 = vmatpush2.msra.mxu0 0.0
        %833 = vmatprep.subr.mxu0 0.0
        %834 = vmatpush2.msra.mxu0 0.0
        %835 = vmatprep.subr.mxu0 0.0
        %836 = vmatpush2.msra.mxu0 0.0
        %837 = vmatprep.mubr.f32.mxu0 0.0
        %838 = vmatmul.mubr.f32.gmra.mxu0 %v771
        %v839 = vpop.f32.mrf.mxu0
        %v840 = vadd.f32 0.0, %v839
        %v841 = vpop.f32.mrf.mxu0
        %842 = vdwg.mxu0
        %v843 = vrcp.pop %v766
        %v844 = vmul.f32 %v840, %v843
        %845 = vst.msk [vmem:[%s387] sm:$0xff] %vm681, %v844
        %v846 = vld [vmem:[#allocation2] sm:$0xff]
        %847 = vrot.lane.b32.xlu0 %v670, 120
        %v848 = vpop.permute.xlu0 %847
        %850 = vrot.lane.b32.xlu0 %v846, 120
        %v851 = vpop.permute.xlu0 %850
        %v852 = vsel %vm681, %v848, 0
        %v854 = vsel %vm681, %v851, 0
        %856 = vmatprep.subr.mxu0 0.0
        %857 = vmatpush1.xpose.msra.mxu0 0.0
        %858 = vmatprep.subr.mxu0 0.0
        %859 = vmatpush1.xpose.msra.mxu0 0.0
        %860 = vmatprep.subr.mxu0 0.0
        %861 = vmatpush1.xpose.msra.mxu0 0.0
        %862 = vmatprep.subr.mxu0 0.0
        %863 = vmatpush1.xpose.msra.mxu0 0.0
        %864 = vmatprep.subr.mxu0 0.0
        %865 = vmatpush1.xpose.msra.mxu0 0.0
        %866 = vmatprep.subr.mxu0 0.0
        %867 = vmatpush1.xpose.msra.mxu0 0.0
        %868 = vmatprep.subr.mxu0 0.0
        %869 = vmatpush1.xpose.msra.mxu0 0.0
        %870 = vmatprep.subr.mxu0 0.0
        %871 = vmatpush1.xpose.msra.mxu0 0.0
        %872 = vmatprep.subr.mxu0 0.0
        %873 = vmatpush1.xpose.msra.mxu0 0.0
        %874 = vmatprep.subr.mxu0 0.0
        %875 = vmatpush1.xpose.msra.mxu0 0.0
        %876 = vmatprep.subr.mxu0 0.0
        %877 = vmatpush1.xpose.msra.mxu0 0.0
        %878 = vmatprep.subr.mxu0 0.0
        %879 = vmatpush1.xpose.msra.mxu0 0.0
        %880 = vmatprep.subr.mxu0 0.0
        %881 = vmatpush1.xpose.msra.mxu0 0.0
        %882 = vmatprep.subr.mxu0 0.0
        %883 = vmatpush1.xpose.msra.mxu0 0.0
        %884 = vmatprep.subr.mxu0 0.0
        %885 = vmatpush1.xpose.msra.mxu0 0.0
        %886 = vmatprep.subr.mxu0 0.0
        %887 = vmatpush1.xpose.msra.mxu0 %v854
        %888 = vmatprep.subr.mxu0 0.0
        %889 = vmatpush2.xpose.msra.mxu0 0.0
        %890 = vmatprep.subr.mxu0 0.0
        %891 = vmatpush2.xpose.msra.mxu0 0.0
        %892 = vmatprep.subr.mxu0 0.0
        %893 = vmatpush2.xpose.msra.mxu0 0.0
        %894 = vmatprep.subr.mxu0 0.0
        %895 = vmatpush2.xpose.msra.mxu0 0.0
        %896 = vmatprep.subr.mxu0 0.0
        %897 = vmatpush2.xpose.msra.mxu0 0.0
        %898 = vmatprep.subr.mxu0 0.0
        %899 = vmatpush2.xpose.msra.mxu0 0.0
        %900 = vmatprep.subr.mxu0 0.0
        %901 = vmatpush2.xpose.msra.mxu0 0.0
        %902 = vmatprep.subr.mxu0 0.0
        %903 = vmatpush2.xpose.msra.mxu0 0.0
        %904 = vmatprep.subr.mxu0 0.0
        %905 = vmatpush2.xpose.msra.mxu0 0.0
        %906 = vmatprep.subr.mxu0 0.0
        %907 = vmatpush2.xpose.msra.mxu0 0.0
        %908 = vmatprep.subr.mxu0 0.0
        %909 = vmatpush2.xpose.msra.mxu0 0.0
        %910 = vmatprep.subr.mxu0 0.0
        %911 = vmatpush2.xpose.msra.mxu0 0.0
        %912 = vmatprep.subr.mxu0 0.0
        %913 = vmatpush2.xpose.msra.mxu0 0.0
        %914 = vmatprep.subr.mxu0 0.0
        %915 = vmatpush2.xpose.msra.mxu0 0.0
        %916 = vmatprep.subr.mxu0 0.0
        %917 = vmatpush2.xpose.msra.mxu0 0.0
        %918 = vmatprep.subr.mxu0 0.0
        %919 = vmatpush2.xpose.msra.mxu0 0.0
        %920 = vmatprep.mubr.f32.mxu0 0.0
        %921 = vmatmul.mubr.f32.gmra.mxu0 %v852
        %v922 = vpop.f32.mrf.mxu0
        %v923 = vadd.f32 %v679, %v922
        %v924 = vpop.f32.mrf.mxu0
        %925 = vdwg.mxu0
        %v926 = vsel %vm681, %v923, -inf
        %927 = vmax.xlane.f32.xlu0 %v926
        %v928 = vpop.xlane.xlu0 %927
        %v929 = vsub.f32 %v923, %v928
        %v930 = vmul.f32 %v929, 1.442695
        %v931 = vpow.pop %v930
        %v932 = vsel %vm681, %v931, 0.0
        %933 = vadd.xlane.f32.xlu0 %v932
        %v934 = vpop.xlane.xlu0 %933
        %935 = vrot.lane.b32.xlu0 %v846, 88
        %v936 = vpop.permute.xlu0 %935
        %v939 = vsel %vm681, %v931, 0
        %941 = vmatprep.subr.mxu0 0.0
        %942 = vmatpush1.msra.mxu0 0.0
        %943 = vmatprep.subr.mxu0 0.0
        %944 = vmatpush1.msra.mxu0 0.0
        %945 = vmatprep.subr.mxu0 0.0
        %946 = vmatpush1.msra.mxu0 0.0
        %947 = vmatprep.subr.mxu0 0.0
        %948 = vmatpush1.msra.mxu0 0.0
        %949 = vmatprep.subr.mxu0 0.0
        %950 = vmatpush1.msra.mxu0 0.0
        %951 = vmatprep.subr.mxu0 0.0
        %952 = vmatpush1.msra.mxu0 0.0
        %953 = vmatprep.subr.mxu0 0.0
        %954 = vmatpush1.msra.mxu0 0.0
        %955 = vmatprep.subr.mxu0 0.0
        %956 = vmatpush1.msra.mxu0 0.0
        %957 = vmatprep.subr.mxu0 0.0
        %958 = vmatpush1.msra.mxu0 0.0
        %959 = vmatprep.subr.mxu0 0.0
        %960 = vmatpush1.msra.mxu0 0.0
        %961 = vmatprep.subr.mxu0 0.0
        %962 = vmatpush1.msra.mxu0 0.0
        %963 = vmatprep.subr.mxu0 0.0
        %964 = vmatpush1.msra.mxu0 0.0
        %965 = vmatprep.subr.mxu0 0.0
        %966 = vmatpush1.msra.mxu0 0.0
        %967 = vmatprep.subr.mxu0 0.0
        %968 = vmatpush1.msra.mxu0 0.0
        %969 = vmatprep.subr.mxu0 0.0
        %970 = vmatpush1.msra.mxu0 0.0
        %971 = vmatprep.subr.mxu0 0.0
        %972 = vmatpush1.msra.mxu0 %v936
        %973 = vmatprep.subr.mxu0 0.0
        %974 = vmatpush2.msra.mxu0 0.0
        %975 = vmatprep.subr.mxu0 0.0
        %976 = vmatpush2.msra.mxu0 0.0
        %977 = vmatprep.subr.mxu0 0.0
        %978 = vmatpush2.msra.mxu0 0.0
        %979 = vmatprep.subr.mxu0 0.0
        %980 = vmatpush2.msra.mxu0 0.0
        %981 = vmatprep.subr.mxu0 0.0
        %982 = vmatpush2.msra.mxu0 0.0
        %983 = vmatprep.subr.mxu0 0.0
        %984 = vmatpush2.msra.mxu0 0.0
        %985 = vmatprep.subr.mxu0 0.0
        %986 = vmatpush2.msra.mxu0 0.0
        %987 = vmatprep.subr.mxu0 0.0
        %988 = vmatpush2.msra.mxu0 0.0
        %989 = vmatprep.subr.mxu0 0.0
        %990 = vmatpush2.msra.mxu0 0.0
        %991 = vmatprep.subr.mxu0 0.0
        %992 = vmatpush2.msra.mxu0 0.0
        %993 = vmatprep.subr.mxu0 0.0
        %994 = vmatpush2.msra.mxu0 0.0
        %995 = vmatprep.subr.mxu0 0.0
        %996 = vmatpush2.msra.mxu0 0.0
        %997 = vmatprep.subr.mxu0 0.0
        %998 = vmatpush2.msra.mxu0 0.0
        %999 = vmatprep.subr.mxu0 0.0
        %1000 = vmatpush2.msra.mxu0 0.0
        %1001 = vmatprep.subr.mxu0 0.0
        %1002 = vmatpush2.msra.mxu0 0.0
        %1003 = vmatprep.subr.mxu0 0.0
        %1004 = vmatpush2.msra.mxu0 0.0
        %1005 = vmatprep.mubr.f32.mxu0 0.0
        %1006 = vmatmul.mubr.f32.gmra.mxu0 %v939
        %v1007 = vpop.f32.mrf.mxu0
        %v1008 = vadd.f32 0.0, %v1007
        %v1009 = vpop.f32.mrf.mxu0
        %1010 = vdwg.mxu0
        %v1011 = vrcp.pop %v934
        %v1012 = vmul.f32 %v1008, %v1011
        %1014 = vrot.lane.b32.xlu0 %v1012, 8
        %v1015 = vpop.permute.xlu0 %1014
        %vm1017 = vcmask 130112
        %1018 = vst.msk [vmem:[%s387] sm:$0xff] %vm1017, %v1015
        %v1019 = vld [vmem:[#allocation2] sm:$0xff]
        %1020 = vrot.lane.b32.xlu0 %v670, 112
        %v1021 = vpop.permute.xlu0 %1020
        %1023 = vrot.lane.b32.xlu0 %v1019, 112
        %v1024 = vpop.permute.xlu0 %1023
        %v1025 = vsel %vm681, %v1021, 0
        %v1027 = vsel %vm681, %v1024, 0
        %1029 = vmatprep.subr.mxu0 0.0
        %1030 = vmatpush1.xpose.msra.mxu0 0.0
        %1031 = vmatprep.subr.mxu0 0.0
        %1032 = vmatpush1.xpose.msra.mxu0 0.0
        %1033 = vmatprep.subr.mxu0 0.0
        %1034 = vmatpush1.xpose.msra.mxu0 0.0
        %1035 = vmatprep.subr.mxu0 0.0
        %1036 = vmatpush1.xpose.msra.mxu0 0.0
        %1037 = vmatprep.subr.mxu0 0.0
        %1038 = vmatpush1.xpose.msra.mxu0 0.0
        %1039 = vmatprep.subr.mxu0 0.0
        %1040 = vmatpush1.xpose.msra.mxu0 0.0
        %1041 = vmatprep.subr.mxu0 0.0
        %1042 = vmatpush1.xpose.msra.mxu0 0.0
        %1043 = vmatprep.subr.mxu0 0.0
        %1044 = vmatpush1.xpose.msra.mxu0 0.0
        %1045 = vmatprep.subr.mxu0 0.0
        %1046 = vmatpush1.xpose.msra.mxu0 0.0
        %1047 = vmatprep.subr.mxu0 0.0
        %1048 = vmatpush1.xpose.msra.mxu0 0.0
        %1049 = vmatprep.subr.mxu0 0.0
        %1050 = vmatpush1.xpose.msra.mxu0 0.0
        %1051 = vmatprep.subr.mxu0 0.0
        %1052 = vmatpush1.xpose.msra.mxu0 0.0
        %1053 = vmatprep.subr.mxu0 0.0
        %1054 = vmatpush1.xpose.msra.mxu0 0.0
        %1055 = vmatprep.subr.mxu0 0.0
        %1056 = vmatpush1.xpose.msra.mxu0 0.0
        %1057 = vmatprep.subr.mxu0 0.0
        %1058 = vmatpush1.xpose.msra.mxu0 0.0
        %1059 = vmatprep.subr.mxu0 0.0
        %1060 = vmatpush1.xpose.msra.mxu0 %v1027
        %1061 = vmatprep.subr.mxu0 0.0
        %1062 = vmatpush2.xpose.msra.mxu0 0.0
        %1063 = vmatprep.subr.mxu0 0.0
        %1064 = vmatpush2.xpose.msra.mxu0 0.0
        %1065 = vmatprep.subr.mxu0 0.0
        %1066 = vmatpush2.xpose.msra.mxu0 0.0
        %1067 = vmatprep.subr.mxu0 0.0
        %1068 = vmatpush2.xpose.msra.mxu0 0.0
        %1069 = vmatprep.subr.mxu0 0.0
        %1070 = vmatpush2.xpose.msra.mxu0 0.0
        %1071 = vmatprep.subr.mxu0 0.0
        %1072 = vmatpush2.xpose.msra.mxu0 0.0
        %1073 = vmatprep.subr.mxu0 0.0
        %1074 = vmatpush2.xpose.msra.mxu0 0.0
        %1075 = vmatprep.subr.mxu0 0.0
        %1076 = vmatpush2.xpose.msra.mxu0 0.0
        %1077 = vmatprep.subr.mxu0 0.0
        %1078 = vmatpush2.xpose.msra.mxu0 0.0
        %1079 = vmatprep.subr.mxu0 0.0
        %1080 = vmatpush2.xpose.msra.mxu0 0.0
        %1081 = vmatprep.subr.mxu0 0.0
        %1082 = vmatpush2.xpose.msra.mxu0 0.0
        %1083 = vmatprep.subr.mxu0 0.0
        %1084 = vmatpush2.xpose.msra.mxu0 0.0
        %1085 = vmatprep.subr.mxu0 0.0
        %1086 = vmatpush2.xpose.msra.mxu0 0.0
        %1087 = vmatprep.subr.mxu0 0.0
        %1088 = vmatpush2.xpose.msra.mxu0 0.0
        %1089 = vmatprep.subr.mxu0 0.0
        %1090 = vmatpush2.xpose.msra.mxu0 0.0
        %1091 = vmatprep.subr.mxu0 0.0
        %1092 = vmatpush2.xpose.msra.mxu0 0.0
        %1093 = vmatprep.mubr.f32.mxu0 0.0
        %1094 = vmatmul.mubr.f32.gmra.mxu0 %v1025
        %v1095 = vpop.f32.mrf.mxu0
        %v1096 = vadd.f32 %v679, %v1095
        %v1097 = vpop.f32.mrf.mxu0
        %1098 = vdwg.mxu0
        %v1099 = vsel %vm681, %v1096, -inf
        %1100 = vmax.xlane.f32.xlu0 %v1099
        %v1101 = vpop.xlane.xlu0 %1100
        %v1102 = vsub.f32 %v1096, %v1101
        %v1103 = vmul.f32 %v1102, 1.442695
        %v1104 = vpow.pop %v1103
        %v1105 = vsel %vm681, %v1104, 0.0
        %1106 = vadd.xlane.f32.xlu0 %v1105
        %v1107 = vpop.xlane.xlu0 %1106
        %1108 = vrot.lane.b32.xlu0 %v1019, 80
        %v1109 = vpop.permute.xlu0 %1108
        %v1112 = vsel %vm681, %v1104, 0
        %1114 = vmatprep.subr.mxu0 0.0
        %1115 = vmatpush1.msra.mxu0 0.0
        %1116 = vmatprep.subr.mxu0 0.0
        %1117 = vmatpush1.msra.mxu0 0.0
        %1118 = vmatprep.subr.mxu0 0.0
        %1119 = vmatpush1.msra.mxu0 0.0
        %1120 = vmatprep.subr.mxu0 0.0
        %1121 = vmatpush1.msra.mxu0 0.0
        %1122 = vmatprep.subr.mxu0 0.0
        %1123 = vmatpush1.msra.mxu0 0.0
        %1124 = vmatprep.subr.mxu0 0.0
        %1125 = vmatpush1.msra.mxu0 0.0
        %1126 = vmatprep.subr.mxu0 0.0
        %1127 = vmatpush1.msra.mxu0 0.0
        %1128 = vmatprep.subr.mxu0 0.0
        %1129 = vmatpush1.msra.mxu0 0.0
        %1130 = vmatprep.subr.mxu0 0.0
        %1131 = vmatpush1.msra.mxu0 0.0
        %1132 = vmatprep.subr.mxu0 0.0
        %1133 = vmatpush1.msra.mxu0 0.0
        %1134 = vmatprep.subr.mxu0 0.0
        %1135 = vmatpush1.msra.mxu0 0.0
        %1136 = vmatprep.subr.mxu0 0.0
        %1137 = vmatpush1.msra.mxu0 0.0
        %1138 = vmatprep.subr.mxu0 0.0
        %1139 = vmatpush1.msra.mxu0 0.0
        %1140 = vmatprep.subr.mxu0 0.0
        %1141 = vmatpush1.msra.mxu0 0.0
        %1142 = vmatprep.subr.mxu0 0.0
        %1143 = vmatpush1.msra.mxu0 0.0
        %1144 = vmatprep.subr.mxu0 0.0
        %1145 = vmatpush1.msra.mxu0 %v1109
        %1146 = vmatprep.subr.mxu0 0.0
        %1147 = vmatpush2.msra.mxu0 0.0
        %1148 = vmatprep.subr.mxu0 0.0
        %1149 = vmatpush2.msra.mxu0 0.0
        %1150 = vmatprep.subr.mxu0 0.0
        %1151 = vmatpush2.msra.mxu0 0.0
        %1152 = vmatprep.subr.mxu0 0.0
        %1153 = vmatpush2.msra.mxu0 0.0
        %1154 = vmatprep.subr.mxu0 0.0
        %1155 = vmatpush2.msra.mxu0 0.0
        %1156 = vmatprep.subr.mxu0 0.0
        %1157 = vmatpush2.msra.mxu0 0.0
        %1158 = vmatprep.subr.mxu0 0.0
        %1159 = vmatpush2.msra.mxu0 0.0
        %1160 = vmatprep.subr.mxu0 0.0
        %1161 = vmatpush2.msra.mxu0 0.0
        %1162 = vmatprep.subr.mxu0 0.0
        %1163 = vmatpush2.msra.mxu0 0.0
        %1164 = vmatprep.subr.mxu0 0.0
        %1165 = vmatpush2.msra.mxu0 0.0
        %1166 = vmatprep.subr.mxu0 0.0
        %1167 = vmatpush2.msra.mxu0 0.0
        %1168 = vmatprep.subr.mxu0 0.0
        %1169 = vmatpush2.msra.mxu0 0.0
        %1170 = vmatprep.subr.mxu0 0.0
        %1171 = vmatpush2.msra.mxu0 0.0
        %1172 = vmatprep.subr.mxu0 0.0
        %1173 = vmatpush2.msra.mxu0 0.0
        %1174 = vmatprep.subr.mxu0 0.0
        %1175 = vmatpush2.msra.mxu0 0.0
        %1176 = vmatprep.subr.mxu0 0.0
        %1177 = vmatpush2.msra.mxu0 0.0
        %1178 = vmatprep.mubr.f32.mxu0 0.0
        %1179 = vmatmul.mubr.f32.gmra.mxu0 %v1112
        %v1180 = vpop.f32.mrf.mxu0
        %v1181 = vadd.f32 0.0, %v1180
        %v1182 = vpop.f32.mrf.mxu0
        %1183 = vdwg.mxu0
        %v1184 = vrcp.pop %v1107
        %v1185 = vmul.f32 %v1181, %v1184
        %1187 = vrot.lane.b32.xlu0 %v1185, 16
        %v1188 = vpop.permute.xlu0 %1187
        %vm1190 = vcmask 195712
        %1191 = vst.msk [vmem:[%s387] sm:$0xff] %vm1190, %v1188
        %v1192 = vld [vmem:[#allocation2] sm:$0xff]
        %1193 = vrot.lane.b32.xlu0 %v670, 104
        %v1194 = vpop.permute.xlu0 %1193
        %1196 = vrot.lane.b32.xlu0 %v1192, 104
        %v1197 = vpop.permute.xlu0 %1196
        %v1198 = vsel %vm681, %v1194, 0
        %v1200 = vsel %vm681, %v1197, 0
        %1202 = vmatprep.subr.mxu0 0.0
        %1203 = vmatpush1.xpose.msra.mxu0 0.0
        %1204 = vmatprep.subr.mxu0 0.0
        %1205 = vmatpush1.xpose.msra.mxu0 0.0
        %1206 = vmatprep.subr.mxu0 0.0
        %1207 = vmatpush1.xpose.msra.mxu0 0.0
        %1208 = vmatprep.subr.mxu0 0.0
        %1209 = vmatpush1.xpose.msra.mxu0 0.0
        %1210 = vmatprep.subr.mxu0 0.0
        %1211 = vmatpush1.xpose.msra.mxu0 0.0
        %1212 = vmatprep.subr.mxu0 0.0
        %1213 = vmatpush1.xpose.msra.mxu0 0.0
        %1214 = vmatprep.subr.mxu0 0.0
        %1215 = vmatpush1.xpose.msra.mxu0 0.0
        %1216 = vmatprep.subr.mxu0 0.0
        %1217 = vmatpush1.xpose.msra.mxu0 0.0
        %1218 = vmatprep.subr.mxu0 0.0
        %1219 = vmatpush1.xpose.msra.mxu0 0.0
        %1220 = vmatprep.subr.mxu0 0.0
        %1221 = vmatpush1.xpose.msra.mxu0 0.0
        %1222 = vmatprep.subr.mxu0 0.0
        %1223 = vmatpush1.xpose.msra.mxu0 0.0
        %1224 = vmatprep.subr.mxu0 0.0
        %1225 = vmatpush1.xpose.msra.mxu0 0.0
        %1226 = vmatprep.subr.mxu0 0.0
        %1227 = vmatpush1.xpose.msra.mxu0 0.0
        %1228 = vmatprep.subr.mxu0 0.0
        %1229 = vmatpush1.xpose.msra.mxu0 0.0
        %1230 = vmatprep.subr.mxu0 0.0
        %1231 = vmatpush1.xpose.msra.mxu0 0.0
        %1232 = vmatprep.subr.mxu0 0.0
        %1233 = vmatpush1.xpose.msra.mxu0 %v1200
        %1234 = vmatprep.subr.mxu0 0.0
        %1235 = vmatpush2.xpose.msra.mxu0 0.0
        %1236 = vmatprep.subr.mxu0 0.0
        %1237 = vmatpush2.xpose.msra.mxu0 0.0
        %1238 = vmatprep.subr.mxu0 0.0
        %1239 = vmatpush2.xpose.msra.mxu0 0.0
        %1240 = vmatprep.subr.mxu0 0.0
        %1241 = vmatpush2.xpose.msra.mxu0 0.0
        %1242 = vmatprep.subr.mxu0 0.0
        %1243 = vmatpush2.xpose.msra.mxu0 0.0
        %1244 = vmatprep.subr.mxu0 0.0
        %1245 = vmatpush2.xpose.msra.mxu0 0.0
        %1246 = vmatprep.subr.mxu0 0.0
        %1247 = vmatpush2.xpose.msra.mxu0 0.0
        %1248 = vmatprep.subr.mxu0 0.0
        %1249 = vmatpush2.xpose.msra.mxu0 0.0
        %1250 = vmatprep.subr.mxu0 0.0
        %1251 = vmatpush2.xpose.msra.mxu0 0.0
        %1252 = vmatprep.subr.mxu0 0.0
        %1253 = vmatpush2.xpose.msra.mxu0 0.0
        %1254 = vmatprep.subr.mxu0 0.0
        %1255 = vmatpush2.xpose.msra.mxu0 0.0
        %1256 = vmatprep.subr.mxu0 0.0
        %1257 = vmatpush2.xpose.msra.mxu0 0.0
        %1258 = vmatprep.subr.mxu0 0.0
        %1259 = vmatpush2.xpose.msra.mxu0 0.0
        %1260 = vmatprep.subr.mxu0 0.0
        %1261 = vmatpush2.xpose.msra.mxu0 0.0
        %1262 = vmatprep.subr.mxu0 0.0
        %1263 = vmatpush2.xpose.msra.mxu0 0.0
        %1264 = vmatprep.subr.mxu0 0.0
        %1265 = vmatpush2.xpose.msra.mxu0 0.0
        %1266 = vmatprep.mubr.f32.mxu0 0.0
        %1267 = vmatmul.mubr.f32.gmra.mxu0 %v1198
        %v1268 = vpop.f32.mrf.mxu0
        %v1269 = vadd.f32 %v679, %v1268
        %v1270 = vpop.f32.mrf.mxu0
        %1271 = vdwg.mxu0
        %v1272 = vsel %vm681, %v1269, -inf
        %1273 = vmax.xlane.f32.xlu0 %v1272
        %v1274 = vpop.xlane.xlu0 %1273
        %v1275 = vsub.f32 %v1269, %v1274
        %v1276 = vmul.f32 %v1275, 1.442695
        %v1277 = vpow.pop %v1276
        %v1278 = vsel %vm681, %v1277, 0.0
        %1279 = vadd.xlane.f32.xlu0 %v1278
        %v1280 = vpop.xlane.xlu0 %1279
        %1281 = vrot.lane.b32.xlu0 %v1192, 72
        %v1282 = vpop.permute.xlu0 %1281
        %v1285 = vsel %vm681, %v1277, 0
        %1287 = vmatprep.subr.mxu0 0.0
        %1288 = vmatpush1.msra.mxu0 0.0
        %1289 = vmatprep.subr.mxu0 0.0
        %1290 = vmatpush1.msra.mxu0 0.0
        %1291 = vmatprep.subr.mxu0 0.0
        %1292 = vmatpush1.msra.mxu0 0.0
        %1293 = vmatprep.subr.mxu0 0.0
        %1294 = vmatpush1.msra.mxu0 0.0
        %1295 = vmatprep.subr.mxu0 0.0
        %1296 = vmatpush1.msra.mxu0 0.0
        %1297 = vmatprep.subr.mxu0 0.0
        %1298 = vmatpush1.msra.mxu0 0.0
        %1299 = vmatprep.subr.mxu0 0.0
        %1300 = vmatpush1.msra.mxu0 0.0
        %1301 = vmatprep.subr.mxu0 0.0
        %1302 = vmatpush1.msra.mxu0 0.0
        %1303 = vmatprep.subr.mxu0 0.0
        %1304 = vmatpush1.msra.mxu0 0.0
        %1305 = vmatprep.subr.mxu0 0.0
        %1306 = vmatpush1.msra.mxu0 0.0
        %1307 = vmatprep.subr.mxu0 0.0
        %1308 = vmatpush1.msra.mxu0 0.0
        %1309 = vmatprep.subr.mxu0 0.0
        %1310 = vmatpush1.msra.mxu0 0.0
        %1311 = vmatprep.subr.mxu0 0.0
        %1312 = vmatpush1.msra.mxu0 0.0
        %1313 = vmatprep.subr.mxu0 0.0
        %1314 = vmatpush1.msra.mxu0 0.0
        %1315 = vmatprep.subr.mxu0 0.0
        %1316 = vmatpush1.msra.mxu0 0.0
        %1317 = vmatprep.subr.mxu0 0.0
        %1318 = vmatpush1.msra.mxu0 %v1282
        %1319 = vmatprep.subr.mxu0 0.0
        %1320 = vmatpush2.msra.mxu0 0.0
        %1321 = vmatprep.subr.mxu0 0.0
        %1322 = vmatpush2.msra.mxu0 0.0
        %1323 = vmatprep.subr.mxu0 0.0
        %1324 = vmatpush2.msra.mxu0 0.0
        %1325 = vmatprep.subr.mxu0 0.0
        %1326 = vmatpush2.msra.mxu0 0.0
        %1327 = vmatprep.subr.mxu0 0.0
        %1328 = vmatpush2.msra.mxu0 0.0
        %1329 = vmatprep.subr.mxu0 0.0
        %1330 = vmatpush2.msra.mxu0 0.0
        %1331 = vmatprep.subr.mxu0 0.0
        %1332 = vmatpush2.msra.mxu0 0.0
        %1333 = vmatprep.subr.mxu0 0.0
        %1334 = vmatpush2.msra.mxu0 0.0
        %1335 = vmatprep.subr.mxu0 0.0
        %1336 = vmatpush2.msra.mxu0 0.0
        %1337 = vmatprep.subr.mxu0 0.0
        %1338 = vmatpush2.msra.mxu0 0.0
        %1339 = vmatprep.subr.mxu0 0.0
        %1340 = vmatpush2.msra.mxu0 0.0
        %1341 = vmatprep.subr.mxu0 0.0
        %1342 = vmatpush2.msra.mxu0 0.0
        %1343 = vmatprep.subr.mxu0 0.0
        %1344 = vmatpush2.msra.mxu0 0.0
        %1345 = vmatprep.subr.mxu0 0.0
        %1346 = vmatpush2.msra.mxu0 0.0
        %1347 = vmatprep.subr.mxu0 0.0
        %1348 = vmatpush2.msra.mxu0 0.0
        %1349 = vmatprep.subr.mxu0 0.0
        %1350 = vmatpush2.msra.mxu0 0.0
        %1351 = vmatprep.mubr.f32.mxu0 0.0
        %1352 = vmatmul.mubr.f32.gmra.mxu0 %v1285
        %v1353 = vpop.f32.mrf.mxu0
        %v1354 = vadd.f32 0.0, %v1353
        %v1355 = vpop.f32.mrf.mxu0
        %1356 = vdwg.mxu0
        %v1357 = vrcp.pop %v1280
        %v1358 = vmul.f32 %v1354, %v1357
        %1360 = vrot.lane.b32.xlu0 %v1358, 24
        %v1361 = vpop.permute.xlu0 %1360
        %vm1363 = vcmask 261312
        %1364 = vst.msk [vmem:[%s387] sm:$0xff] %vm1363, %v1361
        %s1365 = sand.u32 %s214, 1
        %s1366 = scalar_lea.sflag [#allocation5], %s1365
        %s1367 = sand.u32 %s214, 1
        %s1368 = smul.addr %s1367, 8
        %s1369 = scalar_lea.vmem [#allocation11], %s1368
        // Predicated region
        $region69: #{tpu_custom_call.1} parent=47 // pred_check
          %p1370 = pneg %p224
        $region70: #{tpu_custom_call.1} parent=47 // pred_check_branch
          %1372 = sbr.rel (%p1370) target = $region72
        $region71: #{tpu_custom_call.1} parent=47 // pred_region
          %s1374 = ssub.s32 128, 128
          %1375 = vsyncadd %s1366, %s1374
          %s1376 = sadd.s32 %s33, %s32
          %s1377 = smul.addr %s1376, 128
          %s1378 = scalar_lea.hbm %s7, %s1377
          %s1380 = sshll.u32 %s1369, 4
          %s1381 = int_to_ptr.vmem [resolvable:$true] %s1380
          %1383 = dma.vmem_to_hbm [thread:$0]  %s1381, 128, %s1378, %s1366
        $region72: #{tpu_custom_call.1} parent=47 // pred_fallthru
          _
      $region48: #{tpu_custom_call.1} parent=5 // pred_fallthru
        _
      %p1384 = scmp.le.s32.totalorder 2, %s23
      // Predicated region
      $region73: #{tpu_custom_call.1} parent=5 // pred_check
        %p1385 = pneg %p1384
      $region74: #{tpu_custom_call.1} parent=5 // pred_check_branch
        %1387 = sbr.rel (%p1385) target = $region76
      $region75: #{tpu_custom_call.1} parent=5 // pred_region
        %s1388 = ssub.s32 %s23, 2
        // Predicated region
        $region77: #{tpu_custom_call.1} parent=75 // pred_check
          %p1389 = pneg %p230
        $region78: #{tpu_custom_call.1} parent=75 // pred_check_branch
          %1391 = sbr.rel (%p1389) target = $region80
        $region79: #{tpu_custom_call.1} parent=75 // pred_region
          %s1392 = sand.u32 %s215, 1
          %s1393 = scalar_lea.sflag [#allocation5], %s1392
          %s1394 = sand.u32 %s215, 1
          %s1395 = smul.addr %s1394, 8
          %s1396 = scalar_lea.vmem [#allocation11], %s1395
          %1397 = dma.done %s1393, 128
        $region80: #{tpu_custom_call.1} parent=75 // pred_fallthru
          _
      $region76: #{tpu_custom_call.1} parent=5 // pred_fallthru
        _
    $region6: #{tpu_custom_call.1} parent=1 // loop_footer
      %s27 = sadd.s32 1, %s23
    $region7: #{tpu_custom_call.1} parent=1 // loop_footer_branch
      %22 = sbr.rel target = $region3
    $region8: #{tpu_custom_call.1} parent=1 // loop_exit
      _
    %1398 = vsyncpa [#allocation4], 1
    %s1399 = scalar_lea.sflag [#allocation4], 1
    %1400 = vsyncpa %s1399, 1
    %1401 = vsyncpa [#allocation7], 1
    %s1402 = scalar_lea.sflag [#allocation7], 1
    %1403 = vsyncpa %s1402, 1
    %1404 = vsyncpa [#allocation10], 1
    %1405 = vsyncpa [#allocation5], 1
    %s1406 = scalar_lea.sflag [#allocation5], 1
    %1407 = vsyncpa %s1406, 1

</llo_original>
